<compile_context>
chip_gen: v6e
topology: v6e:2x2x1
jax: 0.10.0
libtpu: 0.0.40
codegen_flags: <defaults>
</compile_context>

<pallas_src>
import math

import jax
import jax.numpy as jnp
from jax.experimental import pallas as pl
from jax.experimental.pallas import tpu as pltpu

HID_TOK = 64
HID_ENC = 128
LN_EPS = 1e-5
MAX_POIS = 10  # reference clamps the Poisson sample at 10


# --------------------------------------------------------------------------
# In-kernel helpers
# --------------------------------------------------------------------------
def _layernorm(x, g, b):
    # Single-pass: both reductions can issue back-to-back on the XLU.
    mu = jnp.mean(x, axis=-1, keepdims=True)
    ex2 = jnp.mean(x * x, axis=-1, keepdims=True)
    var = ex2 - mu * mu
    return (x - mu) * jax.lax.rsqrt(var + LN_EPS) * g + b


def _dot(x, w_ref):
    # bf16 operands, f32 accumulation (native MXU rate on v5e/v6e/v7x).
    return jnp.dot(x.astype(jnp.bfloat16), w_ref[...],
                   preferred_element_type=jnp.float32)


# --------------------------------------------------------------------------
# Kernel
# --------------------------------------------------------------------------
def _poisson_tnn_kernel(
    # data
    obs_ref, tok_ref, u_ref,
    # token_proj
    w_tp1, b_tp1, g_tp1, be_tp1,
    w_tp2, b_tp2, g_tp2, be_tp2,
    # encoder (first-layer weight split into obs / token halves: no concat)
    w_e1o, w_e1t, b_e1, g_e1, be_e1,
    w_e2, b_e2, g_e2, be_e2,
    # lambda head (columns zero-padded to NA_PAD lanes)
    w_lam, b_lam,
    # policy net (w_p1 rows / w_p2 columns zero-padded to NA_PAD)
    w_p1, b_p1, g_p1, be_p1,
    w_p2, b_p2,
    # outputs (lane-dense, NA_PAD wide)
    mu_ref, lam_ref,
):
    f32 = jnp.float32

    # ---- token_proj: Linear -> ReLU -> LN -> Linear -> ReLU -> LN ----
    h = _dot(tok_ref[...], w_tp1) + b_tp1[...]
    h = jnp.maximum(h, 0.0)
    h = _layernorm(h, g_tp1[...], be_tp1[...])
    h = _dot(h, w_tp2) + b_tp2[...]
    h = jnp.maximum(h, 0.0)
    h = _layernorm(h, g_tp2[...], be_tp2[...])

    # ---- encoder on cat([obs, token], dim=1) via split first-layer weight ----
    e = _dot(obs_ref[...], w_e1o) + _dot(h, w_e1t) + b_e1[...]
    e = jnp.maximum(e, 0.0)
    e = _layernorm(e, g_e1[...], be_e1[...])
    e = _dot(e, w_e2) + b_e2[...]
    e = jnp.maximum(e, 0.0)
    e = _layernorm(e, g_e2[...], be_e2[...])

    # ---- lambda head: Linear -> Softplus -> NaN guard -> clamp ----
    lam = _dot(e, w_lam) + b_lam[...]
    lam = jax.nn.softplus(lam)
    # softplus >= 0, so only NaN / +inf are possible; clip maps +inf -> 10.0
    # exactly like nan_to_num(posinf=10.0) followed by clamp.
    lam = jnp.where(jnp.isnan(lam), jnp.float32(1.0), lam)
    lam = jnp.clip(lam, 0.001, 10.0)
    lam_ref[...] = lam

    # ---- Poisson sample = min(Poisson(lam), 10) via inverse CDF ----
    # p_k = exp(-lam) * lam^k / k!,  cdf_k = sum_{j<=k} p_j,
    # sample = #{k in 0..9 : u > cdf_k}  (matches torch.poisson(...).clamp(max=10)
    # since lam <= 10 and the reference clamps at 10).
    u = u_ref[...]

    # lam^k, k = 1..9, via a shallow multiply tree (depth ~4 instead of 8).
    p1 = lam
    p2 = p1 * p1
    p3 = p2 * p1
    p4 = p2 * p2
    p5 = p3 * p2
    p6 = p3 * p3
    p7 = p4 * p3
    p8 = p4 * p4
    p9 = p5 * p4
    powers = [p1, p2, p3, p4, p5, p6, p7, p8, p9]
    inv_fact = [1.0 / math.factorial(k) for k in range(1, MAX_POIS)]

    e0 = jnp.exp(-lam)  # EUP; overlaps with the power tree on the VPU
    terms = [e0] + [e0 * (pk * c) for pk, c in zip(powers, inv_fact)]

    # Hillis-Steele inclusive prefix sum over the 10 terms (log depth).
    cdf = list(terms)
    shift = 1
    while shift < len(cdf):
        cdf = [cdf[k] + cdf[k - shift] if k >= shift else cdf[k]
               for k in range(len(cdf))]
        shift *= 2

    # Count how many cdf levels the uniform exceeds (pairwise tree sum).
    hits = [(u > c).astype(f32) for c in cdf]
    while len(hits) > 1:
        nxt = [hits[i] + hits[i + 1] for i in range(0, len(hits) - 1, 2)]
        if len(hits) % 2:
            nxt.append(hits[-1])
        hits = nxt
    sample = hits[0]  # float counts in [0, 10]

    # ---- policy_net: Linear -> ReLU -> LN -> Linear -> nan_to_num -> tanh ----
    o = _dot(sample, w_p1) + b_p1[...]
    o = jnp.maximum(o, 0.0)
    o = _layernorm(o, g_p1[...], be_p1[...])
    o = _dot(o, w_p2) + b_p2[...]
    o = jnp.nan_to_num(o, nan=0.0, posinf=1.0, neginf=-1.0)
    mu_ref[...] = jnp.tanh(o)  # tanh output is finite: final nan_to_num is a no-op


# --------------------------------------------------------------------------
# Parameter construction (PyTorch-style) and kernel-layout preparation
# --------------------------------------------------------------------------
def init_params(key, num_obs, num_act, token_dim):
    """Deterministic init: PyTorch-style uniform for Linear, ones/zeros for LN."""
    def linear(k, fan_in, fan_out):
        k1, k2 = jax.random.split(k)
        bound = 1.0 / math.sqrt(fan_in)
        w = jax.random.uniform(k1, (fan_in, fan_out), jnp.float32, -bound, bound)
        b = jax.random.uniform(k2, (1, fan_out), jnp.float32, -bound, bound)
        return w, b

    def ln(dim):
        return jnp.ones((1, dim), jnp.float32), jnp.zeros((1, dim), jnp.float32)

    keys = jax.random.split(key, 7)
    p = {}
    p["w_tp1"], p["b_tp1"] = linear(keys[0], token_dim, HID_TOK)
    p["g_tp1"], p["be_tp1"] = ln(HID_TOK)
    p["w_tp2"], p["b_tp2"] = linear(keys[1], HID_TOK, HID_TOK)
    p["g_tp2"], p["be_tp2"] = ln(HID_TOK)
    p["w_e1"], p["b_e1"] = linear(keys[2], num_obs + HID_TOK, HID_ENC)
    p["g_e1"], p["be_e1"] = ln(HID_ENC)
    p["w_e2"], p["b_e2"] = linear(keys[3], HID_ENC, HID_ENC)
    p["g_e2"], p["be_e2"] = ln(HID_ENC)
    p["w_lam"], p["b_lam"] = linear(keys[4], HID_ENC, num_act)
    p["w_p1"], p["b_p1"] = linear(keys[5], num_act, HID_ENC)
    p["g_p1"], p["be_p1"] = ln(HID_ENC)
    p["w_p2"], p["b_p2"] = linear(keys[6], HID_ENC, num_act)
    p["log_std"] = jnp.zeros((num_act,), jnp.float32)
    return p


def _round_up(n, m):
    return ((n + m - 1) // m) * m


def prepare_kernel_params(p, num_obs, num_act):
    """Split / zero-pad / bf16-cast the raw params into the kernel layout."""
    na_pad = _round_up(num_act, 128)
    bf16 = jnp.bfloat16

    def pad_cols(x, n):
        return jnp.pad(x, ((0, 0), (0, n - x.shape[1])))

    def pad_rows(x, n):
        return jnp.pad(x, ((0, n - x.shape[0]), (0, 0)))

    kp = {
        "w_tp1": p["w_tp1"].astype(bf16), "b_tp1": p["b_tp1"],
        "g_tp1": p["g_tp1"], "be_tp1": p["be_tp1"],
        "w_tp2": p["w_tp2"].astype(bf16), "b_tp2": p["b_tp2"],
        "g_tp2": p["g_tp2"], "be_tp2": p["be_tp2"],
        # encoder first layer acts on cat([obs, token]); split into two matmuls
        "w_e1o": p["w_e1"][:num_obs].astype(bf16),
        "w_e1t": p["w_e1"][num_obs:].astype(bf16),
        "b_e1": p["b_e1"], "g_e1": p["g_e1"], "be_e1": p["be_e1"],
        "w_e2": p["w_e2"].astype(bf16), "b_e2": p["b_e2"],
        "g_e2": p["g_e2"], "be_e2": p["be_e2"],
        # heads zero-padded to na_pad lanes so kernel outputs are lane-dense
        "w_lam": pad_cols(p["w_lam"], na_pad).astype(bf16),
        "b_lam": pad_cols(p["b_lam"], na_pad),
        "w_p1": pad_rows(p["w_p1"], na_pad).astype(bf16),  # zero rows: padded
        "b_p1": p["b_p1"], "g_p1": p["g_p1"], "be_p1": p["be_p1"],  # lanes inert
        "w_p2": pad_cols(p["w_p2"], na_pad).astype(bf16),
        "b_p2": pad_cols(p["b_p2"], na_pad),
        "log_std": p["log_std"],
        "num_act": num_act,
        "na_pad": na_pad,
    }
    return kp


_WEIGHT_ORDER = [
    "w_tp1", "b_tp1", "g_tp1", "be_tp1",
    "w_tp2", "b_tp2", "g_tp2", "be_tp2",
    "w_e1o", "w_e1t", "b_e1", "g_e1", "be_e1",
    "w_e2", "b_e2", "g_e2", "be_e2",
    "w_lam", "b_lam",
    "w_p1", "b_p1", "g_p1", "be_p1",
    "w_p2", "b_p2",
]


# --------------------------------------------------------------------------
# Wrapper
# --------------------------------------------------------------------------
def poisson_tnn_forward(kp, obs, token, key):
    B = obs.shape[0]
    num_act = kp["num_act"]
    na_pad = kp["na_pad"]

    # Host-side uniforms for the in-kernel inverse-CDF Poisson sampler.
    u = jax.random.uniform(key, (B, na_pad), jnp.float32)

    # Batch tile: multiple of 8 sublanes when possible, else the whole batch.
    tb = B
    if B % 8 == 0:
        tb = min(B, 128)
        while B % tb:
            tb -= 8
    grid = (pl.cdiv(B, tb),)

    weights = [kp[n] for n in _WEIGHT_ORDER]

    def batch_spec(feat):
        return pl.BlockSpec((tb, feat), lambda i: (i, 0))

    def const_spec(arr):
        # Full-array block, constant index map -> stays VMEM-resident
        # across grid steps (no per-step weight re-DMA).
        return pl.BlockSpec(arr.shape, lambda i: (0, 0))

    in_specs = (
        [batch_spec(obs.shape[1]), batch_spec(token.shape[1]), batch_spec(na_pad)]
        + [const_spec(w) for w in weights]
    )
    out_specs = (
        pl.BlockSpec((tb, na_pad), lambda i: (i, 0)),
        pl.BlockSpec((tb, na_pad), lambda i: (i, 0)),
    )

    mu_pad, lam_pad = pl.pallas_call(
        _poisson_tnn_kernel,
        out_shape=(
            jax.ShapeDtypeStruct((B, na_pad), jnp.float32),
            jax.ShapeDtypeStruct((B, na_pad), jnp.float32),
        ),
        grid=grid,
        in_specs=in_specs,
        out_specs=out_specs,
        compiler_params=pltpu.CompilerParams(
            dimension_semantics=("parallel",)),
    )(obs, token, u, *weights)

    mu = mu_pad[:, :num_act]
    lam = lam_pad[:, :num_act]

    # Normal(mu, std) "distribution": return its parameters.
    std = jax.nn.softplus(kp["log_std"]) + 0.001
    std = jnp.nan_to_num(std, nan=1.0, posinf=10.0, neginf=0.001)
    return (mu, std), lam


# --------------------------------------------------------------------------
# Demo / smoke test
# --------------------------------------------------------------------------
if __name__ == "__main__":
    B, NUM_OBS, NUM_ACT, TOKEN_DIM = 8, 16, 8, 32

    root = jax.random.PRNGKey(0)
    k_params, k_obs, k_tok, k_u = jax.random.split(root, 4)

    raw = init_params(k_params, NUM_OBS, NUM_ACT, TOKEN_DIM)
    kp = prepare_kernel_params(raw, NUM_OBS, NUM_ACT)

    obs = jax.random.normal(k_obs, (B, NUM_OBS), jnp.float32)
    token = jax.random.normal(k_tok, (B, TOKEN_DIM), jnp.float32)

    (mu, std), lam = poisson_tnn_forward(kp, obs, token, k_u)
    jax.block_until_ready((mu, std, lam))

    assert mu.shape == (B, NUM_ACT) and lam.shape == (B, NUM_ACT)
    assert std.shape == (NUM_ACT,)
    assert bool(jnp.all(jnp.isfinite(mu))) and bool(jnp.all(jnp.isfinite(lam)))
    assert bool(jnp.all(lam >= 0.001)) and bool(jnp.all(lam <= 10.0))
    assert bool(jnp.all(jnp.abs(mu) <= 1.0))
    print("KERNEL_OK")
</pallas_src>

<mosaic_0001>
module attributes {stable_mosaic.version = 11 : i64} {
  func.func @_poisson_tnn_kernel(%arg0: i32, %arg1: memref<8x16xf32, #tpu.memory_space<vmem>>, %arg2: memref<8x32xf32, #tpu.memory_space<vmem>>, %arg3: memref<8x128xf32, #tpu.memory_space<vmem>>, %arg4: memref<32x64xbf16, #tpu.memory_space<vmem>>, %arg5: memref<1x64xf32, #tpu.memory_space<vmem>>, %arg6: memref<1x64xf32, #tpu.memory_space<vmem>>, %arg7: memref<1x64xf32, #tpu.memory_space<vmem>>, %arg8: memref<64x64xbf16, #tpu.memory_space<vmem>>, %arg9: memref<1x64xf32, #tpu.memory_space<vmem>>, %arg10: memref<1x64xf32, #tpu.memory_space<vmem>>, %arg11: memref<1x64xf32, #tpu.memory_space<vmem>>, %arg12: memref<16x128xbf16, #tpu.memory_space<vmem>>, %arg13: memref<64x128xbf16, #tpu.memory_space<vmem>>, %arg14: memref<1x128xf32, #tpu.memory_space<vmem>>, %arg15: memref<1x128xf32, #tpu.memory_space<vmem>>, %arg16: memref<1x128xf32, #tpu.memory_space<vmem>>, %arg17: memref<128x128xbf16, #tpu.memory_space<vmem>>, %arg18: memref<1x128xf32, #tpu.memory_space<vmem>>, %arg19: memref<1x128xf32, #tpu.memory_space<vmem>>, %arg20: memref<1x128xf32, #tpu.memory_space<vmem>>, %arg21: memref<128x128xbf16, #tpu.memory_space<vmem>>, %arg22: memref<1x128xf32, #tpu.memory_space<vmem>>, %arg23: memref<128x128xbf16, #tpu.memory_space<vmem>>, %arg24: memref<1x128xf32, #tpu.memory_space<vmem>>, %arg25: memref<1x128xf32, #tpu.memory_space<vmem>>, %arg26: memref<1x128xf32, #tpu.memory_space<vmem>>, %arg27: memref<128x128xbf16, #tpu.memory_space<vmem>>, %arg28: memref<1x128xf32, #tpu.memory_space<vmem>>, %arg29: memref<8x128xf32, #tpu.memory_space<vmem>>, %arg30: memref<8x128xf32, #tpu.memory_space<vmem>>) attributes {dimension_semantics = [#tpu.dimension_semantics<parallel>], iteration_bounds = array<i64: 1>, scalar_prefetch = 0 : i64, scratch_operands = 0 : i64, tpu.core_type = #tpu.core_type<tc>, window_params = [{transform_indices = @transform_0, window_bounds = array<i64: 8, 16>}, {transform_indices = @transform_1, window_bounds = array<i64: 8, 32>}, {transform_indices = @transform_2, window_bounds = array<i64: 8, 128>}, {pipeline_mode = #tpu.pipeline_mode<synchronous>, transform_indices = @transform_3, window_bounds = array<i64: 32, 64>}, {pipeline_mode = #tpu.pipeline_mode<synchronous>, transform_indices = @transform_4, window_bounds = array<i64: 1, 64>}, {pipeline_mode = #tpu.pipeline_mode<synchronous>, transform_indices = @transform_5, window_bounds = array<i64: 1, 64>}, {pipeline_mode = #tpu.pipeline_mode<synchronous>, transform_indices = @transform_6, window_bounds = array<i64: 1, 64>}, {pipeline_mode = #tpu.pipeline_mode<synchronous>, transform_indices = @transform_7, window_bounds = array<i64: 64, 64>}, {pipeline_mode = #tpu.pipeline_mode<synchronous>, transform_indices = @transform_8, window_bounds = array<i64: 1, 64>}, {pipeline_mode = #tpu.pipeline_mode<synchronous>, transform_indices = @transform_9, window_bounds = array<i64: 1, 64>}, {pipeline_mode = #tpu.pipeline_mode<synchronous>, transform_indices = @transform_10, window_bounds = array<i64: 1, 64>}, {pipeline_mode = #tpu.pipeline_mode<synchronous>, transform_indices = @transform_11, window_bounds = array<i64: 16, 128>}, {pipeline_mode = #tpu.pipeline_mode<synchronous>, transform_indices = @transform_12, window_bounds = array<i64: 64, 128>}, {pipeline_mode = #tpu.pipeline_mode<synchronous>, transform_indices = @transform_13, window_bounds = array<i64: 1, 128>}, {pipeline_mode = #tpu.pipeline_mode<synchronous>, transform_indices = @transform_14, window_bounds = array<i64: 1, 128>}, {pipeline_mode = #tpu.pipeline_mode<synchronous>, transform_indices = @transform_15, window_bounds = array<i64: 1, 128>}, {pipeline_mode = #tpu.pipeline_mode<synchronous>, transform_indices = @transform_16, window_bounds = array<i64: 128, 128>}, {pipeline_mode = #tpu.pipeline_mode<synchronous>, transform_indices = @transform_17, window_bounds = array<i64: 1, 128>}, {pipeline_mode = #tpu.pipeline_mode<synchronous>, transform_indices = @transform_18, window_bounds = array<i64: 1, 128>}, {pipeline_mode = #tpu.pipeline_mode<synchronous>, transform_indices = @transform_19, window_bounds = array<i64: 1, 128>}, {pipeline_mode = #tpu.pipeline_mode<synchronous>, transform_indices = @transform_20, window_bounds = array<i64: 128, 128>}, {pipeline_mode = #tpu.pipeline_mode<synchronous>, transform_indices = @transform_21, window_bounds = array<i64: 1, 128>}, {pipeline_mode = #tpu.pipeline_mode<synchronous>, transform_indices = @transform_22, window_bounds = array<i64: 128, 128>}, {pipeline_mode = #tpu.pipeline_mode<synchronous>, transform_indices = @transform_23, window_bounds = array<i64: 1, 128>}, {pipeline_mode = #tpu.pipeline_mode<synchronous>, transform_indices = @transform_24, window_bounds = array<i64: 1, 128>}, {pipeline_mode = #tpu.pipeline_mode<synchronous>, transform_indices = @transform_25, window_bounds = array<i64: 1, 128>}, {pipeline_mode = #tpu.pipeline_mode<synchronous>, transform_indices = @transform_26, window_bounds = array<i64: 128, 128>}, {pipeline_mode = #tpu.pipeline_mode<synchronous>, transform_indices = @transform_27, window_bounds = array<i64: 1, 128>}, {transform_indices = @transform_28, window_bounds = array<i64: 8, 128>}, {transform_indices = @transform_29, window_bounds = array<i64: 8, 128>}]} {
    %c0 = arith.constant 0 : index
    %c0_0 = arith.constant 0 : index
    %0 = vector.load %arg2[%c0, %c0_0] : memref<8x32xf32, #tpu.memory_space<vmem>>, vector<8x32xf32>
    %1 = arith.truncf %0 : vector<8x32xf32> to vector<8x32xbf16>
    %c0_1 = arith.constant 0 : index
    %c0_2 = arith.constant 0 : index
    %2 = vector.load %arg4[%c0_1, %c0_2] : memref<32x64xbf16, #tpu.memory_space<vmem>>, vector<32x64xbf16>
    %cst = arith.constant dense<0.000000e+00> : vector<8x64xf32>
    %3 = tpu.matmul %1, %2, %cst {dimension_numbers = #tpu.dot_dimension_numbers<[1], [0], [0], [1], [0, 0, 1, 1], [], []>} : vector<8x32xbf16>, vector<32x64xbf16>, vector<8x64xf32> -> vector<8x64xf32>
    %c0_3 = arith.constant 0 : index
    %c0_4 = arith.constant 0 : index
    %4 = vector.load %arg5[%c0_3, %c0_4] : memref<1x64xf32, #tpu.memory_space<vmem>>, vector<1x64xf32>
    %5 = vector.broadcast %4 : vector<1x64xf32> to vector<8x64xf32>
    %6 = arith.addf %3, %5 : vector<8x64xf32>
    %cst_5 = arith.constant 0.000000e+00 : f32
    %7 = vector.broadcast %cst_5 : f32 to vector<8x64xf32>
    %8 = arith.maximumf %6, %7 : vector<8x64xf32>
    %c0_6 = arith.constant 0 : index
    %c0_7 = arith.constant 0 : index
    %9 = vector.load %arg6[%c0_6, %c0_7] : memref<1x64xf32, #tpu.memory_space<vmem>>, vector<1x64xf32>
    %c0_8 = arith.constant 0 : index
    %c0_9 = arith.constant 0 : index
    %10 = vector.load %arg7[%c0_8, %c0_9] : memref<1x64xf32, #tpu.memory_space<vmem>>, vector<1x64xf32>
    %cst_10 = arith.constant dense<0.000000e+00> : vector<8xf32>
    %11 = vector.multi_reduction <add>, %8, %cst_10 [1] : vector<8x64xf32> to vector<8xf32>
    %12 = vector.shape_cast %11 : vector<8xf32> to vector<8x1xf32>
    %cst_11 = arith.constant 6.400000e+01 : f32
    %13 = vector.broadcast %cst_11 : f32 to vector<8x1xf32>
    %14 = arith.divf %12, %13 : vector<8x1xf32>
    %15 = arith.mulf %8, %8 : vector<8x64xf32>
    %cst_12 = arith.constant dense<0.000000e+00> : vector<8xf32>
    %16 = vector.multi_reduction <add>, %15, %cst_12 [1] : vector<8x64xf32> to vector<8xf32>
    %17 = vector.shape_cast %16 : vector<8xf32> to vector<8x1xf32>
    %cst_13 = arith.constant 6.400000e+01 : f32
    %18 = vector.broadcast %cst_13 : f32 to vector<8x1xf32>
    %19 = arith.divf %17, %18 : vector<8x1xf32>
    %20 = arith.mulf %14, %14 : vector<8x1xf32>
    %21 = arith.subf %19, %20 : vector<8x1xf32>
    %22 = vector.broadcast %14 : vector<8x1xf32> to vector<8x64xf32>
    %23 = arith.subf %8, %22 : vector<8x64xf32>
    %cst_14 = arith.constant 9.99999974E-6 : f32
    %24 = vector.broadcast %cst_14 : f32 to vector<8x1xf32>
    %25 = arith.addf %21, %24 : vector<8x1xf32>
    %26 = math.rsqrt %25 : vector<8x1xf32>
    %27 = vector.broadcast %26 : vector<8x1xf32> to vector<8x64xf32>
    %28 = arith.mulf %23, %27 : vector<8x64xf32>
    %29 = vector.broadcast %9 : vector<1x64xf32> to vector<8x64xf32>
    %30 = arith.mulf %28, %29 : vector<8x64xf32>
    %31 = vector.broadcast %10 : vector<1x64xf32> to vector<8x64xf32>
    %32 = arith.addf %30, %31 : vector<8x64xf32>
    %33 = arith.truncf %32 : vector<8x64xf32> to vector<8x64xbf16>
    %c0_15 = arith.constant 0 : index
    %c0_16 = arith.constant 0 : index
    %34 = vector.load %arg8[%c0_15, %c0_16] : memref<64x64xbf16, #tpu.memory_space<vmem>>, vector<64x64xbf16>
    %cst_17 = arith.constant dense<0.000000e+00> : vector<8x64xf32>
    %35 = tpu.matmul %33, %34, %cst_17 {dimension_numbers = #tpu.dot_dimension_numbers<[1], [0], [0], [1], [0, 0, 1, 1], [], []>} : vector<8x64xbf16>, vector<64x64xbf16>, vector<8x64xf32> -> vector<8x64xf32>
    %c0_18 = arith.constant 0 : index
    %c0_19 = arith.constant 0 : index
    %36 = vector.load %arg9[%c0_18, %c0_19] : memref<1x64xf32, #tpu.memory_space<vmem>>, vector<1x64xf32>
    %37 = vector.broadcast %36 : vector<1x64xf32> to vector<8x64xf32>
    %38 = arith.addf %35, %37 : vector<8x64xf32>
    %cst_20 = arith.constant 0.000000e+00 : f32
    %39 = vector.broadcast %cst_20 : f32 to vector<8x64xf32>
    %40 = arith.maximumf %38, %39 : vector<8x64xf32>
    %c0_21 = arith.constant 0 : index
    %c0_22 = arith.constant 0 : index
    %41 = vector.load %arg10[%c0_21, %c0_22] : memref<1x64xf32, #tpu.memory_space<vmem>>, vector<1x64xf32>
    %c0_23 = arith.constant 0 : index
    %c0_24 = arith.constant 0 : index
    %42 = vector.load %arg11[%c0_23, %c0_24] : memref<1x64xf32, #tpu.memory_space<vmem>>, vector<1x64xf32>
    %cst_25 = arith.constant dense<0.000000e+00> : vector<8xf32>
    %43 = vector.multi_reduction <add>, %40, %cst_25 [1] : vector<8x64xf32> to vector<8xf32>
    %44 = vector.shape_cast %43 : vector<8xf32> to vector<8x1xf32>
    %cst_26 = arith.constant 6.400000e+01 : f32
    %45 = vector.broadcast %cst_26 : f32 to vector<8x1xf32>
    %46 = arith.divf %44, %45 : vector<8x1xf32>
    %47 = arith.mulf %40, %40 : vector<8x64xf32>
    %cst_27 = arith.constant dense<0.000000e+00> : vector<8xf32>
    %48 = vector.multi_reduction <add>, %47, %cst_27 [1] : vector<8x64xf32> to vector<8xf32>
    %49 = vector.shape_cast %48 : vector<8xf32> to vector<8x1xf32>
    %cst_28 = arith.constant 6.400000e+01 : f32
    %50 = vector.broadcast %cst_28 : f32 to vector<8x1xf32>
    %51 = arith.divf %49, %50 : vector<8x1xf32>
    %52 = arith.mulf %46, %46 : vector<8x1xf32>
    %53 = arith.subf %51, %52 : vector<8x1xf32>
    %54 = vector.broadcast %46 : vector<8x1xf32> to vector<8x64xf32>
    %55 = arith.subf %40, %54 : vector<8x64xf32>
    %cst_29 = arith.constant 9.99999974E-6 : f32
    %56 = vector.broadcast %cst_29 : f32 to vector<8x1xf32>
    %57 = arith.addf %53, %56 : vector<8x1xf32>
    %58 = math.rsqrt %57 : vector<8x1xf32>
    %59 = vector.broadcast %58 : vector<8x1xf32> to vector<8x64xf32>
    %60 = arith.mulf %55, %59 : vector<8x64xf32>
    %61 = vector.broadcast %41 : vector<1x64xf32> to vector<8x64xf32>
    %62 = arith.mulf %60, %61 : vector<8x64xf32>
    %63 = vector.broadcast %42 : vector<1x64xf32> to vector<8x64xf32>
    %64 = arith.addf %62, %63 : vector<8x64xf32>
    %c0_30 = arith.constant 0 : index
    %c0_31 = arith.constant 0 : index
    %65 = vector.load %arg1[%c0_30, %c0_31] : memref<8x16xf32, #tpu.memory_space<vmem>>, vector<8x16xf32>
    %66 = arith.truncf %65 : vector<8x16xf32> to vector<8x16xbf16>
    %c0_32 = arith.constant 0 : index
    %c0_33 = arith.constant 0 : index
    %67 = vector.load %arg12[%c0_32, %c0_33] : memref<16x128xbf16, #tpu.memory_space<vmem>>, vector<16x128xbf16>
    %cst_34 = arith.constant dense<0.000000e+00> : vector<8x128xf32>
    %68 = tpu.matmul %66, %67, %cst_34 {dimension_numbers = #tpu.dot_dimension_numbers<[1], [0], [0], [1], [0, 0, 1, 1], [], []>} : vector<8x16xbf16>, vector<16x128xbf16>, vector<8x128xf32> -> vector<8x128xf32>
    %69 = arith.truncf %64 : vector<8x64xf32> to vector<8x64xbf16>
    %c0_35 = arith.constant 0 : index
    %c0_36 = arith.constant 0 : index
    %70 = vector.load %arg13[%c0_35, %c0_36] : memref<64x128xbf16, #tpu.memory_space<vmem>>, vector<64x128xbf16>
    %cst_37 = arith.constant dense<0.000000e+00> : vector<8x128xf32>
    %71 = tpu.matmul %69, %70, %cst_37 {dimension_numbers = #tpu.dot_dimension_numbers<[1], [0], [0], [1], [0, 0, 1, 1], [], []>} : vector<8x64xbf16>, vector<64x128xbf16>, vector<8x128xf32> -> vector<8x128xf32>
    %72 = arith.addf %68, %71 : vector<8x128xf32>
    %c0_38 = arith.constant 0 : index
    %c0_39 = arith.constant 0 : index
    %73 = vector.load %arg14[%c0_38, %c0_39] : memref<1x128xf32, #tpu.memory_space<vmem>>, vector<1x128xf32>
    %74 = vector.broadcast %73 : vector<1x128xf32> to vector<8x128xf32>
    %75 = arith.addf %72, %74 : vector<8x128xf32>
    %cst_40 = arith.constant 0.000000e+00 : f32
    %76 = vector.broadcast %cst_40 : f32 to vector<8x128xf32>
    %77 = arith.maximumf %75, %76 : vector<8x128xf32>
    %c0_41 = arith.constant 0 : index
    %c0_42 = arith.constant 0 : index
    %78 = vector.load %arg15[%c0_41, %c0_42] : memref<1x128xf32, #tpu.memory_space<vmem>>, vector<1x128xf32>
    %c0_43 = arith.constant 0 : index
    %c0_44 = arith.constant 0 : index
    %79 = vector.load %arg16[%c0_43, %c0_44] : memref<1x128xf32, #tpu.memory_space<vmem>>, vector<1x128xf32>
    %cst_45 = arith.constant dense<0.000000e+00> : vector<8xf32>
    %80 = vector.multi_reduction <add>, %77, %cst_45 [1] : vector<8x128xf32> to vector<8xf32>
    %81 = vector.shape_cast %80 : vector<8xf32> to vector<8x1xf32>
    %cst_46 = arith.constant 1.280000e+02 : f32
    %82 = vector.broadcast %cst_46 : f32 to vector<8x1xf32>
    %83 = arith.divf %81, %82 : vector<8x1xf32>
    %84 = arith.mulf %77, %77 : vector<8x128xf32>
    %cst_47 = arith.constant dense<0.000000e+00> : vector<8xf32>
    %85 = vector.multi_reduction <add>, %84, %cst_47 [1] : vector<8x128xf32> to vector<8xf32>
    %86 = vector.shape_cast %85 : vector<8xf32> to vector<8x1xf32>
    %cst_48 = arith.constant 1.280000e+02 : f32
    %87 = vector.broadcast %cst_48 : f32 to vector<8x1xf32>
    %88 = arith.divf %86, %87 : vector<8x1xf32>
    %89 = arith.mulf %83, %83 : vector<8x1xf32>
    %90 = arith.subf %88, %89 : vector<8x1xf32>
    %91 = vector.broadcast %83 : vector<8x1xf32> to vector<8x128xf32>
    %92 = arith.subf %77, %91 : vector<8x128xf32>
    %cst_49 = arith.constant 9.99999974E-6 : f32
    %93 = vector.broadcast %cst_49 : f32 to vector<8x1xf32>
    %94 = arith.addf %90, %93 : vector<8x1xf32>
    %95 = math.rsqrt %94 : vector<8x1xf32>
    %96 = vector.broadcast %95 : vector<8x1xf32> to vector<8x128xf32>
    %97 = arith.mulf %92, %96 : vector<8x128xf32>
    %98 = vector.broadcast %78 : vector<1x128xf32> to vector<8x128xf32>
    %99 = arith.mulf %97, %98 : vector<8x128xf32>
    %100 = vector.broadcast %79 : vector<1x128xf32> to vector<8x128xf32>
    %101 = arith.addf %99, %100 : vector<8x128xf32>
    %102 = arith.truncf %101 : vector<8x128xf32> to vector<8x128xbf16>
    %c0_50 = arith.constant 0 : index
    %c0_51 = arith.constant 0 : index
    %103 = vector.load %arg17[%c0_50, %c0_51] : memref<128x128xbf16, #tpu.memory_space<vmem>>, vector<128x128xbf16>
    %cst_52 = arith.constant dense<0.000000e+00> : vector<8x128xf32>
    %104 = tpu.matmul %102, %103, %cst_52 {dimension_numbers = #tpu.dot_dimension_numbers<[1], [0], [0], [1], [0, 0, 1, 1], [], []>} : vector<8x128xbf16>, vector<128x128xbf16>, vector<8x128xf32> -> vector<8x128xf32>
    %c0_53 = arith.constant 0 : index
    %c0_54 = arith.constant 0 : index
    %105 = vector.load %arg18[%c0_53, %c0_54] : memref<1x128xf32, #tpu.memory_space<vmem>>, vector<1x128xf32>
    %106 = vector.broadcast %105 : vector<1x128xf32> to vector<8x128xf32>
    %107 = arith.addf %104, %106 : vector<8x128xf32>
    %cst_55 = arith.constant 0.000000e+00 : f32
    %108 = vector.broadcast %cst_55 : f32 to vector<8x128xf32>
    %109 = arith.maximumf %107, %108 : vector<8x128xf32>
    %c0_56 = arith.constant 0 : index
    %c0_57 = arith.constant 0 : index
    %110 = vector.load %arg19[%c0_56, %c0_57] : memref<1x128xf32, #tpu.memory_space<vmem>>, vector<1x128xf32>
    %c0_58 = arith.constant 0 : index
    %c0_59 = arith.constant 0 : index
    %111 = vector.load %arg20[%c0_58, %c0_59] : memref<1x128xf32, #tpu.memory_space<vmem>>, vector<1x128xf32>
    %cst_60 = arith.constant dense<0.000000e+00> : vector<8xf32>
    %112 = vector.multi_reduction <add>, %109, %cst_60 [1] : vector<8x128xf32> to vector<8xf32>
    %113 = vector.shape_cast %112 : vector<8xf32> to vector<8x1xf32>
    %cst_61 = arith.constant 1.280000e+02 : f32
    %114 = vector.broadcast %cst_61 : f32 to vector<8x1xf32>
    %115 = arith.divf %113, %114 : vector<8x1xf32>
    %116 = arith.mulf %109, %109 : vector<8x128xf32>
    %cst_62 = arith.constant dense<0.000000e+00> : vector<8xf32>
    %117 = vector.multi_reduction <add>, %116, %cst_62 [1] : vector<8x128xf32> to vector<8xf32>
    %118 = vector.shape_cast %117 : vector<8xf32> to vector<8x1xf32>
    %cst_63 = arith.constant 1.280000e+02 : f32
    %119 = vector.broadcast %cst_63 : f32 to vector<8x1xf32>
    %120 = arith.divf %118, %119 : vector<8x1xf32>
    %121 = arith.mulf %115, %115 : vector<8x1xf32>
    %122 = arith.subf %120, %121 : vector<8x1xf32>
    %123 = vector.broadcast %115 : vector<8x1xf32> to vector<8x128xf32>
    %124 = arith.subf %109, %123 : vector<8x128xf32>
    %cst_64 = arith.constant 9.99999974E-6 : f32
    %125 = vector.broadcast %cst_64 : f32 to vector<8x1xf32>
    %126 = arith.addf %122, %125 : vector<8x1xf32>
    %127 = math.rsqrt %126 : vector<8x1xf32>
    %128 = vector.broadcast %127 : vector<8x1xf32> to vector<8x128xf32>
    %129 = arith.mulf %124, %128 : vector<8x128xf32>
    %130 = vector.broadcast %110 : vector<1x128xf32> to vector<8x128xf32>
    %131 = arith.mulf %129, %130 : vector<8x128xf32>
    %132 = vector.broadcast %111 : vector<1x128xf32> to vector<8x128xf32>
    %133 = arith.addf %131, %132 : vector<8x128xf32>
    %134 = arith.truncf %133 : vector<8x128xf32> to vector<8x128xbf16>
    %c0_65 = arith.constant 0 : index
    %c0_66 = arith.constant 0 : index
    %135 = vector.load %arg21[%c0_65, %c0_66] : memref<128x128xbf16, #tpu.memory_space<vmem>>, vector<128x128xbf16>
    %cst_67 = arith.constant dense<0.000000e+00> : vector<8x128xf32>
    %136 = tpu.matmul %134, %135, %cst_67 {dimension_numbers = #tpu.dot_dimension_numbers<[1], [0], [0], [1], [0, 0, 1, 1], [], []>} : vector<8x128xbf16>, vector<128x128xbf16>, vector<8x128xf32> -> vector<8x128xf32>
    %c0_68 = arith.constant 0 : index
    %c0_69 = arith.constant 0 : index
    %137 = vector.load %arg22[%c0_68, %c0_69] : memref<1x128xf32, #tpu.memory_space<vmem>>, vector<1x128xf32>
    %138 = vector.broadcast %137 : vector<1x128xf32> to vector<8x128xf32>
    %139 = arith.addf %136, %138 : vector<8x128xf32>
    %cst_70 = arith.constant 0.000000e+00 : f32
    %140 = vector.broadcast %cst_70 : f32 to vector<8x128xf32>
    %141 = arith.maximumf %139, %140 : vector<8x128xf32>
    %142 = vector.broadcast %cst_70 : f32 to vector<8x128xf32>
    %143 = arith.subf %139, %142 : vector<8x128xf32>
    %144 = arith.cmpf one, %143, %143 : vector<8x128xf32>
    %145 = vector.broadcast %cst_70 : f32 to vector<8x128xf32>
    %146 = arith.addf %139, %145 : vector<8x128xf32>
    %147 = math.absf %143 : vector<8x128xf32>
    %cst_71 = arith.constant 0.000000e+00 : f32
    %148 = vector.broadcast %cst_71 : f32 to vector<8x128xf32>
    %149 = arith.subf %148, %147 : vector<8x128xf32>
    %150 = math.exp %149 : vector<8x128xf32>
    %151 = math.log1p %150 : vector<8x128xf32>
    %152 = arith.addf %141, %151 : vector<8x128xf32>
    %153 = arith.select %144, %146, %152 : vector<8x128xi1>, vector<8x128xf32>
    %154 = arith.cmpf one, %153, %153 : vector<8x128xf32>
    %cst_72 = arith.constant 1.000000e+00 : f32
    %155 = vector.broadcast %cst_72 : f32 to vector<8x128xf32>
    %156 = arith.select %154, %155, %153 : vector<8x128xi1>, vector<8x128xf32>
    %cst_73 = arith.constant 1.000000e-03 : f32
    %cst_74 = arith.constant 1.000000e+01 : f32
    %157 = vector.broadcast %cst_73 : f32 to vector<8x128xf32>
    %158 = arith.maximumf %157, %156 : vector<8x128xf32>
    %159 = vector.broadcast %cst_74 : f32 to vector<8x128xf32>
    %160 = arith.minimumf %159, %158 : vector<8x128xf32>
    %c0_75 = arith.constant 0 : index
    %c0_76 = arith.constant 0 : index
    %161 = vector.load %arg30[%c0_75, %c0_76] : memref<8x128xf32, #tpu.memory_space<vmem>>, vector<8x128xf32>
    tpu.vector_store %arg30[%c0_75, %c0_76], %160 {strides = array<i32>} : memref<8x128xf32, #tpu.memory_space<vmem>>, vector<8x128xf32>,
    %c0_77 = arith.constant 0 : index
    %c0_78 = arith.constant 0 : index
    %162 = vector.load %arg3[%c0_77, %c0_78] : memref<8x128xf32, #tpu.memory_space<vmem>>, vector<8x128xf32>
    %163 = arith.mulf %160, %160 : vector<8x128xf32>
    %164 = arith.mulf %163, %160 : vector<8x128xf32>
    %165 = arith.mulf %163, %163 : vector<8x128xf32>
    %166 = arith.mulf %164, %163 : vector<8x128xf32>
    %167 = arith.mulf %164, %164 : vector<8x128xf32>
    %168 = arith.mulf %165, %164 : vector<8x128xf32>
    %169 = arith.mulf %165, %165 : vector<8x128xf32>
    %170 = arith.mulf %166, %165 : vector<8x128xf32>
    %cst_79 = arith.constant 0.000000e+00 : f32
    %171 = vector.broadcast %cst_79 : f32 to vector<8x128xf32>
    %172 = arith.subf %171, %160 : vector<8x128xf32>
    %173 = math.exp %172 : vector<8x128xf32>
    %cst_80 = arith.constant 1.000000e+00 : f32
    %174 = vector.broadcast %cst_80 : f32 to vector<8x128xf32>
    %175 = arith.mulf %160, %174 : vector<8x128xf32>
    %176 = arith.mulf %173, %175 : vector<8x128xf32>
    %cst_81 = arith.constant 5.000000e-01 : f32
    %177 = vector.broadcast %cst_81 : f32 to vector<8x128xf32>
    %178 = arith.mulf %163, %177 : vector<8x128xf32>
    %179 = arith.mulf %173, %178 : vector<8x128xf32>
    %cst_82 = arith.constant 0.166666672 : f32
    %180 = vector.broadcast %cst_82 : f32 to vector<8x128xf32>
    %181 = arith.mulf %164, %180 : vector<8x128xf32>
    %182 = arith.mulf %173, %181 : vector<8x128xf32>
    %cst_83 = arith.constant 0.0416666679 : f32
    %183 = vector.broadcast %cst_83 : f32 to vector<8x128xf32>
    %184 = arith.mulf %165, %183 : vector<8x128xf32>
    %185 = arith.mulf %173, %184 : vector<8x128xf32>
    %cst_84 = arith.constant 0.00833333377 : f32
    %186 = vector.broadcast %cst_84 : f32 to vector<8x128xf32>
    %187 = arith.mulf %166, %186 : vector<8x128xf32>
    %188 = arith.mulf %173, %187 : vector<8x128xf32>
    %cst_85 = arith.constant 0.00138888892 : f32
    %189 = vector.broadcast %cst_85 : f32 to vector<8x128xf32>
    %190 = arith.mulf %167, %189 : vector<8x128xf32>
    %191 = arith.mulf %173, %190 : vector<8x128xf32>
    %cst_86 = arith.constant 1.98412701E-4 : f32
    %192 = vector.broadcast %cst_86 : f32 to vector<8x128xf32>
    %193 = arith.mulf %168, %192 : vector<8x128xf32>
    %194 = arith.mulf %173, %193 : vector<8x128xf32>
    %cst_87 = arith.constant 2.48015876E-5 : f32
    %195 = vector.broadcast %cst_87 : f32 to vector<8x128xf32>
    %196 = arith.mulf %169, %195 : vector<8x128xf32>
    %197 = arith.mulf %173, %196 : vector<8x128xf32>
    %cst_88 = arith.constant 2.75573188E-6 : f32
    %198 = vector.broadcast %cst_88 : f32 to vector<8x128xf32>
    %199 = arith.mulf %170, %198 : vector<8x128xf32>
    %200 = arith.mulf %173, %199 : vector<8x128xf32>
    %201 = arith.addf %176, %173 : vector<8x128xf32>
    %202 = arith.addf %179, %176 : vector<8x128xf32>
    %203 = arith.addf %182, %179 : vector<8x128xf32>
    %204 = arith.addf %185, %182 : vector<8x128xf32>
    %205 = arith.addf %188, %185 : vector<8x128xf32>
    %206 = arith.addf %191, %188 : vector<8x128xf32>
    %207 = arith.addf %194, %191 : vector<8x128xf32>
    %208 = arith.addf %197, %194 : vector<8x128xf32>
    %209 = arith.addf %200, %197 : vector<8x128xf32>
    %210 = arith.addf %202, %173 : vector<8x128xf32>
    %211 = arith.addf %203, %201 : vector<8x128xf32>
    %212 = arith.addf %204, %202 : vector<8x128xf32>
    %213 = arith.addf %205, %203 : vector<8x128xf32>
    %214 = arith.addf %206, %204 : vector<8x128xf32>
    %215 = arith.addf %207, %205 : vector<8x128xf32>
    %216 = arith.addf %208, %206 : vector<8x128xf32>
    %217 = arith.addf %209, %207 : vector<8x128xf32>
    %218 = arith.addf %212, %173 : vector<8x128xf32>
    %219 = arith.addf %213, %201 : vector<8x128xf32>
    %220 = arith.addf %214, %210 : vector<8x128xf32>
    %221 = arith.addf %215, %211 : vector<8x128xf32>
    %222 = arith.addf %216, %212 : vector<8x128xf32>
    %223 = arith.addf %217, %213 : vector<8x128xf32>
    %224 = arith.addf %222, %173 : vector<8x128xf32>
    %225 = arith.addf %223, %201 : vector<8x128xf32>
    %226 = arith.cmpf ogt, %162, %173 : vector<8x128xf32>
    %227 = arith.extui %226 : vector<8x128xi1> to vector<8x128xi32>
    %228 = arith.sitofp %227 : vector<8x128xi32> to vector<8x128xf32>
    %229 = arith.cmpf ogt, %162, %201 : vector<8x128xf32>
    %230 = arith.extui %229 : vector<8x128xi1> to vector<8x128xi32>
    %231 = arith.sitofp %230 : vector<8x128xi32> to vector<8x128xf32>
    %232 = arith.cmpf ogt, %162, %210 : vector<8x128xf32>
    %233 = arith.extui %232 : vector<8x128xi1> to vector<8x128xi32>
    %234 = arith.sitofp %233 : vector<8x128xi32> to vector<8x128xf32>
    %235 = arith.cmpf ogt, %162, %211 : vector<8x128xf32>
    %236 = arith.extui %235 : vector<8x128xi1> to vector<8x128xi32>
    %237 = arith.sitofp %236 : vector<8x128xi32> to vector<8x128xf32>
    %238 = arith.cmpf ogt, %162, %218 : vector<8x128xf32>
    %239 = arith.extui %238 : vector<8x128xi1> to vector<8x128xi32>
    %240 = arith.sitofp %239 : vector<8x128xi32> to vector<8x128xf32>
    %241 = arith.cmpf ogt, %162, %219 : vector<8x128xf32>
    %242 = arith.extui %241 : vector<8x128xi1> to vector<8x128xi32>
    %243 = arith.sitofp %242 : vector<8x128xi32> to vector<8x128xf32>
    %244 = arith.cmpf ogt, %162, %220 : vector<8x128xf32>
    %245 = arith.extui %244 : vector<8x128xi1> to vector<8x128xi32>
    %246 = arith.sitofp %245 : vector<8x128xi32> to vector<8x128xf32>
    %247 = arith.cmpf ogt, %162, %221 : vector<8x128xf32>
    %248 = arith.extui %247 : vector<8x128xi1> to vector<8x128xi32>
    %249 = arith.sitofp %248 : vector<8x128xi32> to vector<8x128xf32>
    %250 = arith.cmpf ogt, %162, %224 : vector<8x128xf32>
    %251 = arith.extui %250 : vector<8x128xi1> to vector<8x128xi32>
    %252 = arith.sitofp %251 : vector<8x128xi32> to vector<8x128xf32>
    %253 = arith.cmpf ogt, %162, %225 : vector<8x128xf32>
    %254 = arith.extui %253 : vector<8x128xi1> to vector<8x128xi32>
    %255 = arith.sitofp %254 : vector<8x128xi32> to vector<8x128xf32>
    %256 = arith.addf %228, %231 : vector<8x128xf32>
    %257 = arith.addf %234, %237 : vector<8x128xf32>
    %258 = arith.addf %240, %243 : vector<8x128xf32>
    %259 = arith.addf %246, %249 : vector<8x128xf32>
    %260 = arith.addf %252, %255 : vector<8x128xf32>
    %261 = arith.addf %256, %257 : vector<8x128xf32>
    %262 = arith.addf %258, %259 : vector<8x128xf32>
    %263 = arith.addf %261, %262 : vector<8x128xf32>
    %264 = arith.addf %263, %260 : vector<8x128xf32>
    %265 = arith.truncf %264 : vector<8x128xf32> to vector<8x128xbf16>
    %c0_89 = arith.constant 0 : index
    %c0_90 = arith.constant 0 : index
    %266 = vector.load %arg23[%c0_89, %c0_90] : memref<128x128xbf16, #tpu.memory_space<vmem>>, vector<128x128xbf16>
    %cst_91 = arith.constant dense<0.000000e+00> : vector<8x128xf32>
    %267 = tpu.matmul %265, %266, %cst_91 {dimension_numbers = #tpu.dot_dimension_numbers<[1], [0], [0], [1], [0, 0, 1, 1], [], []>} : vector<8x128xbf16>, vector<128x128xbf16>, vector<8x128xf32> -> vector<8x128xf32>
    %c0_92 = arith.constant 0 : index
    %c0_93 = arith.constant 0 : index
    %268 = vector.load %arg24[%c0_92, %c0_93] : memref<1x128xf32, #tpu.memory_space<vmem>>, vector<1x128xf32>
    %269 = vector.broadcast %268 : vector<1x128xf32> to vector<8x128xf32>
    %270 = arith.addf %267, %269 : vector<8x128xf32>
    %cst_94 = arith.constant 0.000000e+00 : f32
    %271 = vector.broadcast %cst_94 : f32 to vector<8x128xf32>
    %272 = arith.maximumf %270, %271 : vector<8x128xf32>
    %c0_95 = arith.constant 0 : index
    %c0_96 = arith.constant 0 : index
    %273 = vector.load %arg25[%c0_95, %c0_96] : memref<1x128xf32, #tpu.memory_space<vmem>>, vector<1x128xf32>
    %c0_97 = arith.constant 0 : index
    %c0_98 = arith.constant 0 : index
    %274 = vector.load %arg26[%c0_97, %c0_98] : memref<1x128xf32, #tpu.memory_space<vmem>>, vector<1x128xf32>
    %cst_99 = arith.constant dense<0.000000e+00> : vector<8xf32>
    %275 = vector.multi_reduction <add>, %272, %cst_99 [1] : vector<8x128xf32> to vector<8xf32>
    %276 = vector.shape_cast %275 : vector<8xf32> to vector<8x1xf32>
    %cst_100 = arith.constant 1.280000e+02 : f32
    %277 = vector.broadcast %cst_100 : f32 to vector<8x1xf32>
    %278 = arith.divf %276, %277 : vector<8x1xf32>
    %279 = arith.mulf %272, %272 : vector<8x128xf32>
    %cst_101 = arith.constant dense<0.000000e+00> : vector<8xf32>
    %280 = vector.multi_reduction <add>, %279, %cst_101 [1] : vector<8x128xf32> to vector<8xf32>
    %281 = vector.shape_cast %280 : vector<8xf32> to vector<8x1xf32>
    %cst_102 = arith.constant 1.280000e+02 : f32
    %282 = vector.broadcast %cst_102 : f32 to vector<8x1xf32>
    %283 = arith.divf %281, %282 : vector<8x1xf32>
    %284 = arith.mulf %278, %278 : vector<8x1xf32>
    %285 = arith.subf %283, %284 : vector<8x1xf32>
    %286 = vector.broadcast %278 : vector<8x1xf32> to vector<8x128xf32>
    %287 = arith.subf %272, %286 : vector<8x128xf32>
    %cst_103 = arith.constant 9.99999974E-6 : f32
    %288 = vector.broadcast %cst_103 : f32 to vector<8x1xf32>
    %289 = arith.addf %285, %288 : vector<8x1xf32>
    %290 = math.rsqrt %289 : vector<8x1xf32>
    %291 = vector.broadcast %290 : vector<8x1xf32> to vector<8x128xf32>
    %292 = arith.mulf %287, %291 : vector<8x128xf32>
    %293 = vector.broadcast %273 : vector<1x128xf32> to vector<8x128xf32>
    %294 = arith.mulf %292, %293 : vector<8x128xf32>
    %295 = vector.broadcast %274 : vector<1x128xf32> to vector<8x128xf32>
    %296 = arith.addf %294, %295 : vector<8x128xf32>
    %297 = arith.truncf %296 : vector<8x128xf32> to vector<8x128xbf16>
    %c0_104 = arith.constant 0 : index
    %c0_105 = arith.constant 0 : index
    %298 = vector.load %arg27[%c0_104, %c0_105] : memref<128x128xbf16, #tpu.memory_space<vmem>>, vector<128x128xbf16>
    %cst_106 = arith.constant dense<0.000000e+00> : vector<8x128xf32>
    %299 = tpu.matmul %297, %298, %cst_106 {dimension_numbers = #tpu.dot_dimension_numbers<[1], [0], [0], [1], [0, 0, 1, 1], [], []>} : vector<8x128xbf16>, vector<128x128xbf16>, vector<8x128xf32> -> vector<8x128xf32>
    %c0_107 = arith.constant 0 : index
    %c0_108 = arith.constant 0 : index
    %300 = vector.load %arg28[%c0_107, %c0_108] : memref<1x128xf32, #tpu.memory_space<vmem>>, vector<1x128xf32>
    %301 = vector.broadcast %300 : vector<1x128xf32> to vector<8x128xf32>
    %302 = arith.addf %299, %301 : vector<8x128xf32>
    %cst_109 = arith.constant 0.000000e+00 : f32
    %cst_110 = arith.constant -1.000000e+00 : f32
    %cst_111 = arith.constant 1.000000e+00 : f32
    %303 = arith.cmpf one, %302, %302 : vector<8x128xf32>
    %304 = vector.broadcast %cst_109 : f32 to vector<8x128xf32>
    %305 = arith.select %303, %304, %302 : vector<8x128xi1>, vector<8x128xf32>
    %cst_112 = arith.constant 0x7F800000 : f32
    %306 = vector.broadcast %cst_112 : f32 to vector<8x128xf32>
    %307 = arith.cmpf oeq, %305, %306 : vector<8x128xf32>
    %308 = vector.broadcast %cst_111 : f32 to vector<8x128xf32>
    %309 = arith.select %307, %308, %305 : vector<8x128xi1>, vector<8x128xf32>
    %cst_113 = arith.constant 0xFF800000 : f32
    %310 = vector.broadcast %cst_113 : f32 to vector<8x128xf32>
    %311 = arith.cmpf oeq, %309, %310 : vector<8x128xf32>
    %312 = vector.broadcast %cst_110 : f32 to vector<8x128xf32>
    %313 = arith.select %311, %312, %309 : vector<8x128xi1>, vector<8x128xf32>
    %314 = math.tanh %313 : vector<8x128xf32>
    %c0_114 = arith.constant 0 : index
    %c0_115 = arith.constant 0 : index
    %315 = vector.load %arg29[%c0_114, %c0_115] : memref<8x128xf32, #tpu.memory_space<vmem>>, vector<8x128xf32>
    tpu.vector_store %arg29[%c0_114, %c0_115], %314 {strides = array<i32>} : memref<8x128xf32, #tpu.memory_space<vmem>>, vector<8x128xf32>,
    return
  }
  func.func @transform_0(%arg0: i32) -> (i32, i32) {
    %c0_i32 = arith.constant 0 : i32
    %c0_i32_0 = arith.constant 0 : i32
    return %arg0, %c0_i32 : i32, i32
  }
  func.func @transform_1(%arg0: i32) -> (i32, i32) {
    %c0_i32 = arith.constant 0 : i32
    %c0_i32_0 = arith.constant 0 : i32
    return %arg0, %c0_i32 : i32, i32
  }
  func.func @transform_2(%arg0: i32) -> (i32, i32) {
    %c0_i32 = arith.constant 0 : i32
    %c0_i32_0 = arith.constant 0 : i32
    return %arg0, %c0_i32 : i32, i32
  }
  func.func @transform_3(%arg0: i32) -> (i32, i32) {
    %c0_i32 = arith.constant 0 : i32
    %c0_i32_0 = arith.constant 0 : i32
    %c0_i32_1 = arith.constant 0 : i32
    return %c0_i32, %c0_i32_0 : i32, i32
  }
  func.func @transform_4(%arg0: i32) -> (i32, i32) {
    %c0_i32 = arith.constant 0 : i32
    %c0_i32_0 = arith.constant 0 : i32
    %c0_i32_1 = arith.constant 0 : i32
    return %c0_i32, %c0_i32_0 : i32, i32
  }
  func.func @transform_5(%arg0: i32) -> (i32, i32) {
    %c0_i32 = arith.constant 0 : i32
    %c0_i32_0 = arith.constant 0 : i32
    %c0_i32_1 = arith.constant 0 : i32
    return %c0_i32, %c0_i32_0 : i32, i32
  }
  func.func @transform_6(%arg0: i32) -> (i32, i32) {
    %c0_i32 = arith.constant 0 : i32
    %c0_i32_0 = arith.constant 0 : i32
    %c0_i32_1 = arith.constant 0 : i32
    return %c0_i32, %c0_i32_0 : i32, i32
  }
  func.func @transform_7(%arg0: i32) -> (i32, i32) {
    %c0_i32 = arith.constant 0 : i32
    %c0_i32_0 = arith.constant 0 : i32
    %c0_i32_1 = arith.constant 0 : i32
    return %c0_i32, %c0_i32_0 : i32, i32
  }
  func.func @transform_8(%arg0: i32) -> (i32, i32) {
    %c0_i32 = arith.constant 0 : i32
    %c0_i32_0 = arith.constant 0 : i32
    %c0_i32_1 = arith.constant 0 : i32
    return %c0_i32, %c0_i32_0 : i32, i32
  }
  func.func @transform_9(%arg0: i32) -> (i32, i32) {
    %c0_i32 = arith.constant 0 : i32
    %c0_i32_0 = arith.constant 0 : i32
    %c0_i32_1 = arith.constant 0 : i32
    return %c0_i32, %c0_i32_0 : i32, i32
  }
  func.func @transform_10(%arg0: i32) -> (i32, i32) {
    %c0_i32 = arith.constant 0 : i32
    %c0_i32_0 = arith.constant 0 : i32
    %c0_i32_1 = arith.constant 0 : i32
    return %c0_i32, %c0_i32_0 : i32, i32
  }
  func.func @transform_11(%arg0: i32) -> (i32, i32) {
    %c0_i32 = arith.constant 0 : i32
    %c0_i32_0 = arith.constant 0 : i32
    %c0_i32_1 = arith.constant 0 : i32
    return %c0_i32, %c0_i32_0 : i32, i32
  }
  func.func @transform_12(%arg0: i32) -> (i32, i32) {
    %c0_i32 = arith.constant 0 : i32
    %c0_i32_0 = arith.constant 0 : i32
    %c0_i32_1 = arith.constant 0 : i32
    return %c0_i32, %c0_i32_0 : i32, i32
  }
  func.func @transform_13(%arg0: i32) -> (i32, i32) {
    %c0_i32 = arith.constant 0 : i32
    %c0_i32_0 = arith.constant 0 : i32
    %c0_i32_1 = arith.constant 0 : i32
    return %c0_i32, %c0_i32_0 : i32, i32
  }
  func.func @transform_14(%arg0: i32) -> (i32, i32) {
    %c0_i32 = arith.constant 0 : i32
    %c0_i32_0 = arith.constant 0 : i32
    %c0_i32_1 = arith.constant 0 : i32
    return %c0_i32, %c0_i32_0 : i32, i32
  }
  func.func @transform_15(%arg0: i32) -> (i32, i32) {
    %c0_i32 = arith.constant 0 : i32
    %c0_i32_0 = arith.constant 0 : i32
    %c0_i32_1 = arith.constant 0 : i32
    return %c0_i32, %c0_i32_0 : i32, i32
  }
  func.func @transform_16(%arg0: i32) -> (i32, i32) {
    %c0_i32 = arith.constant 0 : i32
    %c0_i32_0 = arith.constant 0 : i32
    %c0_i32_1 = arith.constant 0 : i32
    return %c0_i32, %c0_i32_0 : i32, i32
  }
  func.func @transform_17(%arg0: i32) -> (i32, i32) {
    %c0_i32 = arith.constant 0 : i32
    %c0_i32_0 = arith.constant 0 : i32
    %c0_i32_1 = arith.constant 0 : i32
    return %c0_i32, %c0_i32_0 : i32, i32
  }
  func.func @transform_18(%arg0: i32) -> (i32, i32) {
    %c0_i32 = arith.constant 0 : i32
    %c0_i32_0 = arith.constant 0 : i32
    %c0_i32_1 = arith.constant 0 : i32
    return %c0_i32, %c0_i32_0 : i32, i32
  }
  func.func @transform_19(%arg0: i32) -> (i32, i32) {
    %c0_i32 = arith.constant 0 : i32
    %c0_i32_0 = arith.constant 0 : i32
    %c0_i32_1 = arith.constant 0 : i32
    return %c0_i32, %c0_i32_0 : i32, i32
  }
  func.func @transform_20(%arg0: i32) -> (i32, i32) {
    %c0_i32 = arith.constant 0 : i32
    %c0_i32_0 = arith.constant 0 : i32
    %c0_i32_1 = arith.constant 0 : i32
    return %c0_i32, %c0_i32_0 : i32, i32
  }
  func.func @transform_21(%arg0: i32) -> (i32, i32) {
    %c0_i32 = arith.constant 0 : i32
    %c0_i32_0 = arith.constant 0 : i32
    %c0_i32_1 = arith.constant 0 : i32
    return %c0_i32, %c0_i32_0 : i32, i32
  }
  func.func @transform_22(%arg0: i32) -> (i32, i32) {
    %c0_i32 = arith.constant 0 : i32
    %c0_i32_0 = arith.constant 0 : i32
    %c0_i32_1 = arith.constant 0 : i32
    return %c0_i32, %c0_i32_0 : i32, i32
  }
  func.func @transform_23(%arg0: i32) -> (i32, i32) {
    %c0_i32 = arith.constant 0 : i32
    %c0_i32_0 = arith.constant 0 : i32
    %c0_i32_1 = arith.constant 0 : i32
    return %c0_i32, %c0_i32_0 : i32, i32
  }
  func.func @transform_24(%arg0: i32) -> (i32, i32) {
    %c0_i32 = arith.constant 0 : i32
    %c0_i32_0 = arith.constant 0 : i32
    %c0_i32_1 = arith.constant 0 : i32
    return %c0_i32, %c0_i32_0 : i32, i32
  }
  func.func @transform_25(%arg0: i32) -> (i32, i32) {
    %c0_i32 = arith.constant 0 : i32
    %c0_i32_0 = arith.constant 0 : i32
    %c0_i32_1 = arith.constant 0 : i32
    return %c0_i32, %c0_i32_0 : i32, i32
  }
  func.func @transform_26(%arg0: i32) -> (i32, i32) {
    %c0_i32 = arith.constant 0 : i32
    %c0_i32_0 = arith.constant 0 : i32
    %c0_i32_1 = arith.constant 0 : i32
    return %c0_i32, %c0_i32_0 : i32, i32
  }
  func.func @transform_27(%arg0: i32) -> (i32, i32) {
    %c0_i32 = arith.constant 0 : i32
    %c0_i32_0 = arith.constant 0 : i32
    %c0_i32_1 = arith.constant 0 : i32
    return %c0_i32, %c0_i32_0 : i32, i32
  }
  func.func @transform_28(%arg0: i32) -> (i32, i32) {
    %c0_i32 = arith.constant 0 : i32
    %c0_i32_0 = arith.constant 0 : i32
    return %arg0, %c0_i32 : i32, i32
  }
  func.func @transform_29(%arg0: i32) -> (i32, i32) {
    %c0_i32 = arith.constant 0 : i32
    %c0_i32_0 = arith.constant 0 : i32
    return %arg0, %c0_i32 : i32, i32
  }
}

</mosaic_0001>

<llo_original>
// kernel: tpu_custom_call.1
$region0: #{tpu_custom_call.1}
  #allocation0 [shape = 'u32[]', space=smem, size = 0x4, offset = 0x4, fixed_abs, tag = 'smem constant byte address 0x4 - core index']
  #allocation1 [shape = 'u32[144,128]{1,0:T(1,128)}', space=vmem, size = 0x12000, scoped, tag = 'internal scratch']
  %s0 = inlined_call_operand.smem [shape: u32[30], index: -1, kind: input, shape index: {}]
  %s1 = sld [smem:[%s0]]
  %s2 = scalar_lea.smem %s0, 1
  %s3 = sld [smem:[%s2]]
  %s4 = scalar_lea.smem %s0, 2
  %s5 = sld [smem:[%s4]]
  %s6 = scalar_lea.smem %s0, 3
  %s7 = sld [smem:[%s6]]
  %s8 = scalar_lea.smem %s0, 4
  %s9 = sld [smem:[%s8]]
  %s10 = scalar_lea.smem %s0, 5
  %s11 = sld [smem:[%s10]]
  %s12 = scalar_lea.smem %s0, 6
  %s13 = sld [smem:[%s12]]
  %s14 = scalar_lea.smem %s0, 7
  %s15 = sld [smem:[%s14]]
  %s16 = scalar_lea.smem %s0, 8
  %s17 = sld [smem:[%s16]]
  %s18 = scalar_lea.smem %s0, 9
  %s19 = sld [smem:[%s18]]
  %s20 = scalar_lea.smem %s0, 10
  %s21 = sld [smem:[%s20]]
  %s22 = scalar_lea.smem %s0, 11
  %s23 = sld [smem:[%s22]]
  %s24 = scalar_lea.smem %s0, 12
  %s25 = sld [smem:[%s24]]
  %s26 = scalar_lea.smem %s0, 13
  %s27 = sld [smem:[%s26]]
  %s28 = scalar_lea.smem %s0, 14
  %s29 = sld [smem:[%s28]]
  %s30 = scalar_lea.smem %s0, 15
  %s31 = sld [smem:[%s30]]
  %s32 = scalar_lea.smem %s0, 16
  %s33 = sld [smem:[%s32]]
  %s34 = scalar_lea.smem %s0, 17
  %s35 = sld [smem:[%s34]]
  %s36 = scalar_lea.smem %s0, 18
  %s37 = sld [smem:[%s36]]
  %s38 = scalar_lea.smem %s0, 19
  %s39 = sld [smem:[%s38]]
  %s40 = scalar_lea.smem %s0, 20
  %s41 = sld [smem:[%s40]]
  %s42 = scalar_lea.smem %s0, 21
  %s43 = sld [smem:[%s42]]
  %s44 = scalar_lea.smem %s0, 22
  %s45 = sld [smem:[%s44]]
  %s46 = scalar_lea.smem %s0, 23
  %s47 = sld [smem:[%s46]]
  %s48 = scalar_lea.smem %s0, 24
  %s49 = sld [smem:[%s48]]
  %s50 = scalar_lea.smem %s0, 25
  %s51 = sld [smem:[%s50]]
  %s52 = scalar_lea.smem %s0, 26
  %s53 = sld [smem:[%s52]]
  %s54 = scalar_lea.smem %s0, 27
  %s55 = sld [smem:[%s54]]
  %s56 = scalar_lea.smem %s0, 28
  %s57 = sld [smem:[%s56]]
  %s58 = scalar_lea.smem %s0, 29
  %s59 = sld [smem:[%s58]]
  %60 = xla_tuple %s57, %s59
  %s61 = sld [smem:[#allocation0]]
  $region170: #{tpu_custom_call.1} parent=0
    _
  %s63 = ssub.s32 1, %s61
  %s64 = scalar_select 0, %s63, %s61
  $region1: #{tpu_custom_call.1} parent=0
    #allocation2 [shape = 'u8[4096]{0}', space=vmem, size = 0x1000, scoped, tag = 'input window, operand 0, single buffered']
    #allocation3 [shape = 's32[1]{0}', space=sflag, size = 0x4, scoped, tag = 'scoped memory for tpu_custom_call.1']
    #allocation4 [shape = 's32[1]{0}', space=sflag, size = 0x4, scoped, tag = 'scoped memory for tpu_custom_call.1']
    #allocation5 [shape = 'u8[4096]{0}', space=vmem, size = 0x1000, scoped, tag = 'input window, operand 1, single buffered']
    #allocation6 [shape = 's32[1]{0}', space=sflag, size = 0x4, scoped, tag = 'scoped memory for tpu_custom_call.1']
    #allocation7 [shape = 'u8[4096]{0}', space=vmem, size = 0x1000, scoped, tag = 'input window, operand 2, single buffered']
    #allocation8 [shape = 'u8[8192]{0}', space=vmem, size = 0x2000, scoped, tag = 'input window, operand 3, single buffered']
    #allocation9 [shape = 's32[1]{0}', space=sflag, size = 0x4, scoped, tag = 'scoped memory for tpu_custom_call.1']
    #allocation10 [shape = 'u8[16384]{0}', space=vmem, size = 0x4000, scoped, tag = 'input window, operand 7, single buffered']
    #allocation11 [shape = 'u8[16384]{0}', space=vmem, size = 0x4000, scoped, tag = 'input window, operand 12, single buffered']
    #allocation12 [shape = 's32[1]{0}', space=sflag, size = 0x4, scoped, tag = 'scoped memory for tpu_custom_call.1']
    #allocation13 [shape = 'u8[32768]{0}', space=vmem, size = 0x8000, scoped, tag = 'input window, operand 16, single buffered']
    #allocation14 [shape = 'u8[32768]{0}', space=vmem, size = 0x8000, scoped, tag = 'input window, operand 20, single buffered']
    #allocation15 [shape = 's32[1]{0}', space=sflag, size = 0x4, scoped, tag = 'scoped memory for tpu_custom_call.1']
    #allocation16 [shape = 'u8[32768]{0}', space=vmem, size = 0x8000, scoped, tag = 'input window, operand 22, single buffered']
    #allocation17 [shape = 'u8[32768]{0}', space=vmem, size = 0x8000, scoped, tag = 'input window, operand 26, single buffered']
    #allocation18 [shape = 's32[1]{0}', space=sflag, size = 0x4, scoped, tag = 'scoped memory for tpu_custom_call.1']
    #allocation19 [shape = 'u8[4096]{0}', space=vmem, size = 0x1000, scoped, tag = 'output window, operand 0, single buffered']
    #allocation20 [shape = 'u8[4096]{0}', space=vmem, size = 0x1000, scoped, tag = 'output window, operand 1, single buffered']
    #allocation21 [shape = 's32[1]{0}', space=sflag, size = 0x4, scoped, tag = 'scoped memory for tpu_custom_call.1']
    %65 = vsyncpa [#allocation3], 0
    %66 = vsyncpa [#allocation6], 0
    %67 = vsyncpa [#allocation9], 0
    %68 = vsyncpa [#allocation12], 0
    %69 = vsyncpa [#allocation15], 0
    %70 = vsyncpa [#allocation18], 0
    %71 = vsyncpa [#allocation4], 0
    %72 = vsyncpa [#allocation21], 0
    // Predicated region
    $region2: #{tpu_custom_call.1} parent=1 // pred_check
      _
    $region3: #{tpu_custom_call.1} parent=1 // pred_check_branch
      %74 = sbr.rel (0) target = $region5
    $region4: #{tpu_custom_call.1} parent=1 // pred_region
      %s76 = ssub.s32 128, 128
      %77 = vsyncadd [#allocation3], %s76
      %s79 = sshll.u32 [#allocation2], 4
      %s80 = int_to_ptr.vmem [resolvable:$true] %s79
      %82 = dma.hbm_to_vmem [thread:$0]  %s1, 128, %s80, [#allocation3]
    $region5: #{tpu_custom_call.1} parent=1 // pred_fallthru
      _
    // Predicated region
    $region6: #{tpu_custom_call.1} parent=1 // pred_check
      _
    $region7: #{tpu_custom_call.1} parent=1 // pred_check_branch
      %84 = sbr.rel (0) target = $region9
    $region8: #{tpu_custom_call.1} parent=1 // pred_region
      %s86 = ssub.s32 128, 128
      %87 = vsyncadd [#allocation6], %s86
      %s89 = sshll.u32 [#allocation5], 4
      %s90 = int_to_ptr.vmem [resolvable:$true] %s89
      %92 = dma.hbm_to_vmem [thread:$0]  %s3, 128, %s90, [#allocation6]
    $region9: #{tpu_custom_call.1} parent=1 // pred_fallthru
      _
    // Predicated region
    $region10: #{tpu_custom_call.1} parent=1 // pred_check
      _
    $region11: #{tpu_custom_call.1} parent=1 // pred_check_branch
      %94 = sbr.rel (0) target = $region13
    $region12: #{tpu_custom_call.1} parent=1 // pred_region
      %s96 = ssub.s32 128, 128
      %97 = vsyncadd [#allocation6], %s96
      %s99 = sshll.u32 [#allocation7], 4
      %s100 = int_to_ptr.vmem [resolvable:$true] %s99
      %102 = dma.hbm_to_vmem [thread:$0]  %s5, 128, %s100, [#allocation6]
    $region13: #{tpu_custom_call.1} parent=1 // pred_fallthru
      _
    // Predicated region
    $region14: #{tpu_custom_call.1} parent=1 // pred_check
      _
    $region15: #{tpu_custom_call.1} parent=1 // pred_check_branch
      %104 = sbr.rel (0) target = $region17
    $region16: #{tpu_custom_call.1} parent=1 // pred_region
      %s106 = ssub.s32 256, 256
      %107 = vsyncadd [#allocation9], %s106
      %s108 = sshll.u32 [#allocation8], 4
      %s109 = int_to_ptr.vmem [resolvable:$true] %s108
      %114 = dma.hbm_to_vmem [thread:$0]  %s7, 256, %s109, [#allocation9], 64, 64, 4
    $region17: #{tpu_custom_call.1} parent=1 // pred_fallthru
      _
    // Predicated region
    $region18: #{tpu_custom_call.1} parent=1 // pred_check
      _
    $region19: #{tpu_custom_call.1} parent=1 // pred_check_branch
      %116 = sbr.rel (0) target = $region21
    $region20: #{tpu_custom_call.1} parent=1 // pred_region
      _
    $region21: #{tpu_custom_call.1} parent=1 // pred_fallthru
      _
    // Predicated region
    $region22: #{tpu_custom_call.1} parent=1 // pred_check
      _
    $region23: #{tpu_custom_call.1} parent=1 // pred_check_branch
      %118 = sbr.rel (0) target = $region25
    $region24: #{tpu_custom_call.1} parent=1 // pred_region
      _
    $region25: #{tpu_custom_call.1} parent=1 // pred_fallthru
      _
    // Predicated region
    $region26: #{tpu_custom_call.1} parent=1 // pred_check
      _
    $region27: #{tpu_custom_call.1} parent=1 // pred_check_branch
      %120 = sbr.rel (0) target = $region29
    $region28: #{tpu_custom_call.1} parent=1 // pred_region
      _
    $region29: #{tpu_custom_call.1} parent=1 // pred_fallthru
      _
    // Predicated region
    $region30: #{tpu_custom_call.1} parent=1 // pred_check
      _
    $region31: #{tpu_custom_call.1} parent=1 // pred_check_branch
      %122 = sbr.rel (0) target = $region33
    $region32: #{tpu_custom_call.1} parent=1 // pred_region
      %s124 = ssub.s32 512, 512
      %125 = vsyncadd [#allocation9], %s124
      %s126 = sshll.u32 [#allocation10], 4
      %s127 = int_to_ptr.vmem [resolvable:$true] %s126
      %132 = dma.hbm_to_vmem [thread:$0]  %s15, 512, %s127, [#allocation9], 64, 64, 4
    $region33: #{tpu_custom_call.1} parent=1 // pred_fallthru
      _
    // Predicated region
    $region34: #{tpu_custom_call.1} parent=1 // pred_check
      _
    $region35: #{tpu_custom_call.1} parent=1 // pred_check_branch
      %134 = sbr.rel (0) target = $region37
    $region36: #{tpu_custom_call.1} parent=1 // pred_region
      _
    $region37: #{tpu_custom_call.1} parent=1 // pred_fallthru
      _
    // Predicated region
    $region38: #{tpu_custom_call.1} parent=1 // pred_check
      _
    $region39: #{tpu_custom_call.1} parent=1 // pred_check_branch
      %136 = sbr.rel (0) target = $region41
    $region40: #{tpu_custom_call.1} parent=1 // pred_region
      _
    $region41: #{tpu_custom_call.1} parent=1 // pred_fallthru
      _
    // Predicated region
    $region42: #{tpu_custom_call.1} parent=1 // pred_check
      _
    $region43: #{tpu_custom_call.1} parent=1 // pred_check_branch
      %138 = sbr.rel (0) target = $region45
    $region44: #{tpu_custom_call.1} parent=1 // pred_region
      _
    $region45: #{tpu_custom_call.1} parent=1 // pred_fallthru
      _
    // Predicated region
    $region46: #{tpu_custom_call.1} parent=1 // pred_check
      _
    $region47: #{tpu_custom_call.1} parent=1 // pred_check_branch
      %140 = sbr.rel (0) target = $region49
    $region48: #{tpu_custom_call.1} parent=1 // pred_region
      _
    $region49: #{tpu_custom_call.1} parent=1 // pred_fallthru
      _
    // Predicated region
    $region50: #{tpu_custom_call.1} parent=1 // pred_check
      _
    $region51: #{tpu_custom_call.1} parent=1 // pred_check_branch
      %142 = sbr.rel (0) target = $region53
    $region52: #{tpu_custom_call.1} parent=1 // pred_region
      %s144 = ssub.s32 512, 512
      %145 = vsyncadd [#allocation12], %s144
      %s146 = sshll.u32 [#allocation11], 4
      %s147 = int_to_ptr.vmem [resolvable:$true] %s146
      %152 = dma.hbm_to_vmem [thread:$0]  %s25, 512, %s147, [#allocation12], 64, 64, 4
    $region53: #{tpu_custom_call.1} parent=1 // pred_fallthru
      _
    // Predicated region
    $region54: #{tpu_custom_call.1} parent=1 // pred_check
      _
    $region55: #{tpu_custom_call.1} parent=1 // pred_check_branch
      %154 = sbr.rel (0) target = $region57
    $region56: #{tpu_custom_call.1} parent=1 // pred_region
      _
    $region57: #{tpu_custom_call.1} parent=1 // pred_fallthru
      _
    // Predicated region
    $region58: #{tpu_custom_call.1} parent=1 // pred_check
      _
    $region59: #{tpu_custom_call.1} parent=1 // pred_check_branch
      %156 = sbr.rel (0) target = $region61
    $region60: #{tpu_custom_call.1} parent=1 // pred_region
      _
    $region61: #{tpu_custom_call.1} parent=1 // pred_fallthru
      _
    // Predicated region
    $region62: #{tpu_custom_call.1} parent=1 // pred_check
      _
    $region63: #{tpu_custom_call.1} parent=1 // pred_check_branch
      %158 = sbr.rel (0) target = $region65
    $region64: #{tpu_custom_call.1} parent=1 // pred_region
      _
    $region65: #{tpu_custom_call.1} parent=1 // pred_fallthru
      _
    // Predicated region
    $region66: #{tpu_custom_call.1} parent=1 // pred_check
      _
    $region67: #{tpu_custom_call.1} parent=1 // pred_check_branch
      %160 = sbr.rel (0) target = $region69
    $region68: #{tpu_custom_call.1} parent=1 // pred_region
      %s162 = ssub.s32 1024, 1024
      %163 = vsyncadd [#allocation12], %s162
      %s164 = sshll.u32 [#allocation13], 4
      %s165 = int_to_ptr.vmem [resolvable:$true] %s164
      %170 = dma.hbm_to_vmem [thread:$0]  %s33, 1024, %s165, [#allocation12], 64, 64, 4
    $region69: #{tpu_custom_call.1} parent=1 // pred_fallthru
      _
    // Predicated region
    $region70: #{tpu_custom_call.1} parent=1 // pred_check
      _
    $region71: #{tpu_custom_call.1} parent=1 // pred_check_branch
      %172 = sbr.rel (0) target = $region73
    $region72: #{tpu_custom_call.1} parent=1 // pred_region
      _
    $region73: #{tpu_custom_call.1} parent=1 // pred_fallthru
      _
    // Predicated region
    $region74: #{tpu_custom_call.1} parent=1 // pred_check
      _
    $region75: #{tpu_custom_call.1} parent=1 // pred_check_branch
      %174 = sbr.rel (0) target = $region77
    $region76: #{tpu_custom_call.1} parent=1 // pred_region
      _
    $region77: #{tpu_custom_call.1} parent=1 // pred_fallthru
      _
    // Predicated region
    $region78: #{tpu_custom_call.1} parent=1 // pred_check
      _
    $region79: #{tpu_custom_call.1} parent=1 // pred_check_branch
      %176 = sbr.rel (0) target = $region81
    $region80: #{tpu_custom_call.1} parent=1 // pred_region
      _
    $region81: #{tpu_custom_call.1} parent=1 // pred_fallthru
      _
    // Predicated region
    $region82: #{tpu_custom_call.1} parent=1 // pred_check
      _
    $region83: #{tpu_custom_call.1} parent=1 // pred_check_branch
      %178 = sbr.rel (0) target = $region85
    $region84: #{tpu_custom_call.1} parent=1 // pred_region
      %s180 = ssub.s32 1024, 1024
      %181 = vsyncadd [#allocation15], %s180
      %s182 = sshll.u32 [#allocation14], 4
      %s183 = int_to_ptr.vmem [resolvable:$true] %s182
      %188 = dma.hbm_to_vmem [thread:$0]  %s41, 1024, %s183, [#allocation15], 64, 64, 4
    $region85: #{tpu_custom_call.1} parent=1 // pred_fallthru
      _
    // Predicated region
    $region86: #{tpu_custom_call.1} parent=1 // pred_check
      _
    $region87: #{tpu_custom_call.1} parent=1 // pred_check_branch
      %190 = sbr.rel (0) target = $region89
    $region88: #{tpu_custom_call.1} parent=1 // pred_region
      _
    $region89: #{tpu_custom_call.1} parent=1 // pred_fallthru
      _
    // Predicated region
    $region90: #{tpu_custom_call.1} parent=1 // pred_check
      _
    $region91: #{tpu_custom_call.1} parent=1 // pred_check_branch
      %192 = sbr.rel (0) target = $region93
    $region92: #{tpu_custom_call.1} parent=1 // pred_region
      %s194 = ssub.s32 1024, 1024
      %195 = vsyncadd [#allocation15], %s194
      %s196 = sshll.u32 [#allocation16], 4
      %s197 = int_to_ptr.vmem [resolvable:$true] %s196
      %202 = dma.hbm_to_vmem [thread:$0]  %s45, 1024, %s197, [#allocation15], 64, 64, 4
    $region93: #{tpu_custom_call.1} parent=1 // pred_fallthru
      _
    // Predicated region
    $region94: #{tpu_custom_call.1} parent=1 // pred_check
      _
    $region95: #{tpu_custom_call.1} parent=1 // pred_check_branch
      %204 = sbr.rel (0) target = $region97
    $region96: #{tpu_custom_call.1} parent=1 // pred_region
      _
    $region97: #{tpu_custom_call.1} parent=1 // pred_fallthru
      _
    // Predicated region
    $region98: #{tpu_custom_call.1} parent=1 // pred_check
      _
    $region99: #{tpu_custom_call.1} parent=1 // pred_check_branch
      %206 = sbr.rel (0) target = $region101
    $region100: #{tpu_custom_call.1} parent=1 // pred_region
      _
    $region101: #{tpu_custom_call.1} parent=1 // pred_fallthru
      _
    // Predicated region
    $region102: #{tpu_custom_call.1} parent=1 // pred_check
      _
    $region103: #{tpu_custom_call.1} parent=1 // pred_check_branch
      %208 = sbr.rel (0) target = $region105
    $region104: #{tpu_custom_call.1} parent=1 // pred_region
      _
    $region105: #{tpu_custom_call.1} parent=1 // pred_fallthru
      _
    // Predicated region
    $region106: #{tpu_custom_call.1} parent=1 // pred_check
      _
    $region107: #{tpu_custom_call.1} parent=1 // pred_check_branch
      %210 = sbr.rel (0) target = $region109
    $region108: #{tpu_custom_call.1} parent=1 // pred_region
      %s212 = ssub.s32 1024, 1024
      %213 = vsyncadd [#allocation18], %s212
      %s214 = sshll.u32 [#allocation17], 4
      %s215 = int_to_ptr.vmem [resolvable:$true] %s214
      %220 = dma.hbm_to_vmem [thread:$0]  %s53, 1024, %s215, [#allocation18], 64, 64, 4
    $region109: #{tpu_custom_call.1} parent=1 // pred_fallthru
      _
    // Predicated region
    $region110: #{tpu_custom_call.1} parent=1 // pred_check
      _
    $region111: #{tpu_custom_call.1} parent=1 // pred_check_branch
      %222 = sbr.rel (0) target = $region113
    $region112: #{tpu_custom_call.1} parent=1 // pred_region
      _
    $region113: #{tpu_custom_call.1} parent=1 // pred_fallthru
      _
    // Predicated region
    $region114: #{tpu_custom_call.1} parent=1 // pred_check
      _
    $region115: #{tpu_custom_call.1} parent=1 // pred_check_branch
      %224 = sbr.rel (0) target = $region117
    $region116: #{tpu_custom_call.1} parent=1 // pred_region
      %225 = dma.done [#allocation3], 128
    $region117: #{tpu_custom_call.1} parent=1 // pred_fallthru
      _
    // Predicated region
    $region118: #{tpu_custom_call.1} parent=1 // pred_check
      _
    $region119: #{tpu_custom_call.1} parent=1 // pred_check_branch
      %227 = sbr.rel (0) target = $region121
    $region120: #{tpu_custom_call.1} parent=1 // pred_region
      %228 = dma.done [#allocation6], 128
    $region121: #{tpu_custom_call.1} parent=1 // pred_fallthru
      _
    // Predicated region
    $region122: #{tpu_custom_call.1} parent=1 // pred_check
      _
    $region123: #{tpu_custom_call.1} parent=1 // pred_check_branch
      %230 = sbr.rel (0) target = $region125
    $region124: #{tpu_custom_call.1} parent=1 // pred_region
      %231 = dma.done [#allocation6], 128
    $region125: #{tpu_custom_call.1} parent=1 // pred_fallthru
      _
    // Predicated region
    $region126: #{tpu_custom_call.1} parent=1 // pred_check
      _
    $region127: #{tpu_custom_call.1} parent=1 // pred_check_branch
      %233 = sbr.rel (0) target = $region129
    $region128: #{tpu_custom_call.1} parent=1 // pred_region
      %234 = dma.done [#allocation9], 256
    $region129: #{tpu_custom_call.1} parent=1 // pred_fallthru
      _
    // Predicated region
    $region130: #{tpu_custom_call.1} parent=1 // pred_check
      _
    $region131: #{tpu_custom_call.1} parent=1 // pred_check_branch
      %236 = sbr.rel (0) target = $region133
    $region132: #{tpu_custom_call.1} parent=1 // pred_region
      %237 = dma.done [#allocation9], 512
    $region133: #{tpu_custom_call.1} parent=1 // pred_fallthru
      _
    // Predicated region
    $region134: #{tpu_custom_call.1} parent=1 // pred_check
      _
    $region135: #{tpu_custom_call.1} parent=1 // pred_check_branch
      %239 = sbr.rel (0) target = $region137
    $region136: #{tpu_custom_call.1} parent=1 // pred_region
      %240 = dma.done [#allocation12], 512
    $region137: #{tpu_custom_call.1} parent=1 // pred_fallthru
      _
    // Predicated region
    $region138: #{tpu_custom_call.1} parent=1 // pred_check
      _
    $region139: #{tpu_custom_call.1} parent=1 // pred_check_branch
      %242 = sbr.rel (0) target = $region141
    $region140: #{tpu_custom_call.1} parent=1 // pred_region
      %243 = dma.done [#allocation12], 1024
    $region141: #{tpu_custom_call.1} parent=1 // pred_fallthru
      _
    // Predicated region
    $region142: #{tpu_custom_call.1} parent=1 // pred_check
      _
    $region143: #{tpu_custom_call.1} parent=1 // pred_check_branch
      %245 = sbr.rel (0) target = $region145
    $region144: #{tpu_custom_call.1} parent=1 // pred_region
      %246 = dma.done [#allocation15], 1024
    $region145: #{tpu_custom_call.1} parent=1 // pred_fallthru
      _
    // Predicated region
    $region146: #{tpu_custom_call.1} parent=1 // pred_check
      _
    $region147: #{tpu_custom_call.1} parent=1 // pred_check_branch
      %248 = sbr.rel (0) target = $region149
    $region148: #{tpu_custom_call.1} parent=1 // pred_region
      %249 = dma.done [#allocation15], 1024
    $region149: #{tpu_custom_call.1} parent=1 // pred_fallthru
      _
    // Predicated region
    $region150: #{tpu_custom_call.1} parent=1 // pred_check
      _
    $region151: #{tpu_custom_call.1} parent=1 // pred_check_branch
      %251 = sbr.rel (0) target = $region153
    $region152: #{tpu_custom_call.1} parent=1 // pred_region
      %252 = dma.done [#allocation18], 1024
    $region153: #{tpu_custom_call.1} parent=1 // pred_fallthru
      _
    %v254 = vld [vmem:[#allocation5] sm:$0xff]
    %v255 = vpack.c.bf16 %v254, %v254
    %v256 = vld [vmem:[#allocation8] sm:$0xf]
    %v257 = vld [vmem:[#allocation8 + $0x4] sm:$0xf]
    %v258 = vld [vmem:[#allocation8 + $0x8] sm:$0xf]
    %v259 = vld [vmem:[#allocation8 + $0xc] sm:$0xf]
    %v260 = vld [vmem:[%s9] sm:$0x1]
    %v262 = vlaneseq
    %v263 = vshrl.u32 %v262, 7
    %v264 = vsub.s32 0, %v263
    %v265 = vrot.slane %v260, %v264
    %v271 = vunpack.c.l.b16 %v256
    %v272 = vunpack.c.l.b16 %v257
    %v273 = vunpack.c.l.b16 %v258
    %v274 = vunpack.c.l.b16 %v259
    %v275 = vpack.c.b16 %v272, %v271
    %v276 = vpack.c.b16 %v274, %v273
    %vm279 = vcmask 261120
    %v281 = vsel %vm279, %v255, 0
    %283 = vmatprep.subr.bf16.mxu0 0
    %284 = vmatpush1.bf16.msra.mxu0 0
    %285 = vmatprep.subr.bf16.mxu0 0
    %286 = vmatpush1.bf16.msra.mxu0 0
    %287 = vmatprep.subr.bf16.mxu0 0
    %288 = vmatpush1.bf16.msra.mxu0 0
    %289 = vmatprep.subr.bf16.mxu0 0
    %290 = vmatpush1.bf16.msra.mxu0 0
    %291 = vmatprep.subr.bf16.mxu0 0
    %292 = vmatpush1.bf16.msra.mxu0 0
    %293 = vmatprep.subr.bf16.mxu0 0
    %294 = vmatpush1.bf16.msra.mxu0 0
    %295 = vmatprep.subr.bf16.mxu0 0
    %296 = vmatpush1.bf16.msra.mxu0 %v276
    %297 = vmatprep.subr.bf16.mxu0 0
    %298 = vmatpush1.bf16.msra.mxu0 %v275
    %299 = vmatprep.subr.bf16.mxu0 0
    %300 = vmatpush2.bf16.msra.mxu0 0
    %301 = vmatprep.subr.bf16.mxu0 0
    %302 = vmatpush2.bf16.msra.mxu0 0
    %303 = vmatprep.subr.bf16.mxu0 0
    %304 = vmatpush2.bf16.msra.mxu0 0
    %305 = vmatprep.subr.bf16.mxu0 0
    %306 = vmatpush2.bf16.msra.mxu0 0
    %307 = vmatprep.subr.bf16.mxu0 0
    %308 = vmatpush2.bf16.msra.mxu0 0
    %309 = vmatprep.subr.bf16.mxu0 0
    %310 = vmatpush2.bf16.msra.mxu0 0
    %311 = vmatprep.subr.bf16.mxu0 0
    %312 = vmatpush2.bf16.msra.mxu0 0
    %313 = vmatprep.subr.bf16.mxu0 0
    %314 = vmatpush2.bf16.msra.mxu0 0
    %315 = vmatprep.mubr.bf16.mxu0 0
    %316 = vmatmul.mubr.bf16.gmra.mxu0 %v281
    %v317 = vpop.f32.mrf.mxu0
    %v318 = vadd.f32 %v265, %v317
    %v319 = vpop.f32.mrf.mxu0
    %v320 = vpop.f32.mrf.mxu0
    %v321 = vpop.f32.mrf.mxu0
    %322 = vdwg.mxu0
    %v323 = vmax.f32 %v318, 0.0
    %v324 = vld [vmem:[%s11] sm:$0x1]
    %v325 = vld [vmem:[%s13] sm:$0x1]
    %vm326 = vcmask 523264
    %v327 = vsel %vm326, %v323, 0.0
    %328 = vadd.xlane.f32.xlu0 %v327
    %v329 = vpop.xlane.xlu0 %328
    %v330 = vrcp.pop 64.0
    %v331 = vmul.f32 %v329, %v330
    %v332 = vmul.f32 %v323, %v323
    %v333 = vsel %vm326, %v332, 0.0
    %334 = vadd.xlane.f32.xlu0 %v333
    %v335 = vpop.xlane.xlu0 %334
    %v336 = vmul.f32 %v335, %v330
    %v337 = vmul.f32 %v331, %v331
    %v338 = vsub.f32 %v336, %v337
    %v339 = vsub.f32 %v323, %v331
    %v340 = vadd.f32 %v338, 1e-05
    %v341 = vrsqrt.pop %v340
    %v342 = vmul.f32 %v339, %v341
    %v344 = vlaneseq
    %v345 = vshrl.u32 %v344, 7
    %v346 = vsub.s32 0, %v345
    %v347 = vrot.slane %v324, %v346
    %v349 = vmul.f32 %v342, %v347
    %v351 = vlaneseq
    %v352 = vshrl.u32 %v351, 7
    %v353 = vsub.s32 0, %v352
    %v354 = vrot.slane %v325, %v353
    %v356 = vadd.f32 %v349, %v354
    %v357 = vpack.c.bf16 %v356, %v356
    %v358 = vld [vmem:[#allocation10] sm:$0xf]
    %v359 = vld [vmem:[#allocation10 + $0x4] sm:$0xf]
    %v360 = vld [vmem:[#allocation10 + $0x8] sm:$0xf]
    %v361 = vld [vmem:[#allocation10 + $0xc] sm:$0xf]
    %v362 = vld [vmem:[#allocation10 + $0x10] sm:$0xf]
    %v363 = vld [vmem:[#allocation10 + $0x14] sm:$0xf]
    %v364 = vld [vmem:[#allocation10 + $0x18] sm:$0xf]
    %v365 = vld [vmem:[#allocation10 + $0x1c] sm:$0xf]
    %v366 = vld [vmem:[%s17] sm:$0x1]
    %v368 = vlaneseq
    %v369 = vshrl.u32 %v368, 7
    %v370 = vsub.s32 0, %v369
    %v371 = vrot.slane %v366, %v370
    %v381 = vunpack.c.l.b16 %v358
    %v382 = vunpack.c.l.b16 %v359
    %v383 = vunpack.c.l.b16 %v360
    %v384 = vunpack.c.l.b16 %v361
    %v385 = vunpack.c.l.b16 %v362
    %v386 = vunpack.c.l.b16 %v363
    %v387 = vunpack.c.l.b16 %v364
    %v388 = vunpack.c.l.b16 %v365
    %v389 = vpack.c.b16 %v382, %v381
    %v390 = vpack.c.b16 %v384, %v383
    %v391 = vpack.c.b16 %v386, %v385
    %v392 = vpack.c.b16 %v388, %v387
    %v398 = vsel %vm326, %v357, 0
    %400 = vmatprep.subr.bf16.mxu0 0
    %401 = vmatpush1.bf16.msra.mxu0 0
    %402 = vmatprep.subr.bf16.mxu0 0
    %403 = vmatpush1.bf16.msra.mxu0 0
    %404 = vmatprep.subr.bf16.mxu0 0
    %405 = vmatpush1.bf16.msra.mxu0 0
    %406 = vmatprep.subr.bf16.mxu0 0
    %407 = vmatpush1.bf16.msra.mxu0 0
    %408 = vmatprep.subr.bf16.mxu0 0
    %409 = vmatpush1.bf16.msra.mxu0 %v392
    %410 = vmatprep.subr.bf16.mxu0 0
    %411 = vmatpush1.bf16.msra.mxu0 %v391
    %412 = vmatprep.subr.bf16.mxu0 0
    %413 = vmatpush1.bf16.msra.mxu0 %v390
    %414 = vmatprep.subr.bf16.mxu0 0
    %415 = vmatpush1.bf16.msra.mxu0 %v389
    %416 = vmatprep.subr.bf16.mxu0 0
    %417 = vmatpush2.bf16.msra.mxu0 0
    %418 = vmatprep.subr.bf16.mxu0 0
    %419 = vmatpush2.bf16.msra.mxu0 0
    %420 = vmatprep.subr.bf16.mxu0 0
    %421 = vmatpush2.bf16.msra.mxu0 0
    %422 = vmatprep.subr.bf16.mxu0 0
    %423 = vmatpush2.bf16.msra.mxu0 0
    %424 = vmatprep.subr.bf16.mxu0 0
    %425 = vmatpush2.bf16.msra.mxu0 0
    %426 = vmatprep.subr.bf16.mxu0 0
    %427 = vmatpush2.bf16.msra.mxu0 0
    %428 = vmatprep.subr.bf16.mxu0 0
    %429 = vmatpush2.bf16.msra.mxu0 0
    %430 = vmatprep.subr.bf16.mxu0 0
    %431 = vmatpush2.bf16.msra.mxu0 0
    %432 = vmatprep.mubr.bf16.mxu0 0
    %433 = vmatmul.mubr.bf16.gmra.mxu0 %v398
    %v434 = vpop.f32.mrf.mxu0
    %v435 = vadd.f32 %v371, %v434
    %v436 = vpop.f32.mrf.mxu0
    %v437 = vpop.f32.mrf.mxu0
    %v438 = vpop.f32.mrf.mxu0
    %439 = vdwg.mxu0
    %v440 = vmax.f32 %v435, 0.0
    %v441 = vld [vmem:[%s19] sm:$0x1]
    %v442 = vld [vmem:[%s21] sm:$0x1]
    %v443 = vsel %vm326, %v440, 0.0
    %444 = vadd.xlane.f32.xlu0 %v443
    %v445 = vpop.xlane.xlu0 %444
    %v446 = vmul.f32 %v445, %v330
    %v447 = vmul.f32 %v440, %v440
    %v448 = vsel %vm326, %v447, 0.0
    %449 = vadd.xlane.f32.xlu0 %v448
    %v450 = vpop.xlane.xlu0 %449
    %v451 = vmul.f32 %v450, %v330
    %v452 = vmul.f32 %v446, %v446
    %v453 = vsub.f32 %v451, %v452
    %v454 = vsub.f32 %v440, %v446
    %v455 = vadd.f32 %v453, 1e-05
    %v456 = vrsqrt.pop %v455
    %v457 = vmul.f32 %v454, %v456
    %v459 = vlaneseq
    %v460 = vshrl.u32 %v459, 7
    %v461 = vsub.s32 0, %v460
    %v462 = vrot.slane %v441, %v461
    %v464 = vmul.f32 %v457, %v462
    %v466 = vlaneseq
    %v467 = vshrl.u32 %v466, 7
    %v468 = vsub.s32 0, %v467
    %v469 = vrot.slane %v442, %v468
    %v471 = vadd.f32 %v464, %v469
    %v472 = vld [vmem:[#allocation2] sm:$0xff]
    %v473 = vpack.c.bf16 %v472, %v472
    %v474 = vld [vmem:[%s23] sm:$0xf]
    %v475 = vld [vmem:[%s23 + $0x4] sm:$0xf]
    %v476 = vpack.c.bf16 %v471, %v471
    %v477 = vld [vmem:[#allocation11] sm:$0xf]
    %v478 = vld [vmem:[#allocation11 + $0x4] sm:$0xf]
    %v479 = vld [vmem:[#allocation11 + $0x8] sm:$0xf]
    %v480 = vld [vmem:[#allocation11 + $0xc] sm:$0xf]
    %v481 = vld [vmem:[#allocation11 + $0x10] sm:$0xf]
    %v482 = vld [vmem:[#allocation11 + $0x14] sm:$0xf]
    %v483 = vld [vmem:[#allocation11 + $0x18] sm:$0xf]
    %v484 = vld [vmem:[#allocation11 + $0x1c] sm:$0xf]
    %v493 = vunpack.c.l.b16 %v477
    %v494 = vunpack.c.l.b16 %v478
    %v495 = vunpack.c.l.b16 %v479
    %v496 = vunpack.c.l.b16 %v480
    %v497 = vunpack.c.l.b16 %v481
    %v498 = vunpack.c.l.b16 %v482
    %v499 = vunpack.c.l.b16 %v483
    %v500 = vunpack.c.l.b16 %v484
    %v501 = vpack.c.b16 %v494, %v493
    %v502 = vpack.c.b16 %v496, %v495
    %v503 = vpack.c.b16 %v498, %v497
    %v504 = vpack.c.b16 %v500, %v499
    %v510 = vsel %vm326, %v476, 0
    %512 = vmatprep.subr.bf16.mxu0 0
    %513 = vmatpush1.bf16.msra.mxu0 0
    %514 = vmatprep.subr.bf16.mxu0 0
    %515 = vmatpush1.bf16.msra.mxu0 0
    %516 = vmatprep.subr.bf16.mxu0 0
    %517 = vmatpush1.bf16.msra.mxu0 0
    %518 = vmatprep.subr.bf16.mxu0 0
    %519 = vmatpush1.bf16.msra.mxu0 0
    %520 = vmatprep.subr.bf16.mxu0 0
    %521 = vmatpush1.bf16.msra.mxu0 %v504
    %522 = vmatprep.subr.bf16.mxu0 0
    %523 = vmatpush1.bf16.msra.mxu0 %v503
    %524 = vmatprep.subr.bf16.mxu0 0
    %525 = vmatpush1.bf16.msra.mxu0 %v502
    %526 = vmatprep.subr.bf16.mxu0 0
    %527 = vmatpush1.bf16.msra.mxu0 %v501
    %528 = vmatprep.subr.bf16.mxu0 0
    %529 = vmatpush2.bf16.msra.mxu0 0
    %530 = vmatprep.subr.bf16.mxu0 0
    %531 = vmatpush2.bf16.msra.mxu0 0
    %532 = vmatprep.subr.bf16.mxu0 0
    %533 = vmatpush2.bf16.msra.mxu0 0
    %534 = vmatprep.subr.bf16.mxu0 0
    %535 = vmatpush2.bf16.msra.mxu0 0
    %536 = vmatprep.subr.bf16.mxu0 0
    %537 = vmatpush2.bf16.msra.mxu0 0
    %538 = vmatprep.subr.bf16.mxu0 0
    %539 = vmatpush2.bf16.msra.mxu0 0
    %540 = vmatprep.subr.bf16.mxu0 0
    %541 = vmatpush2.bf16.msra.mxu0 0
    %542 = vmatprep.subr.bf16.mxu0 0
    %543 = vmatpush2.bf16.msra.mxu0 0
    %544 = vmatprep.mubr.bf16.mxu0 0
    %545 = vmatmul.mubr.bf16.gmra.mxu0 %v510
    %v546 = vpop.f32.mrf.mxu0
    %v547 = vadd.f32 0.0, %v546
    %v548 = vpop.f32.mrf.mxu0
    %v549 = vpop.f32.mrf.mxu0
    %v550 = vpop.f32.mrf.mxu0
    %551 = vdwg.mxu0
    %v554 = vunpack.c.l.b16 %v474
    %v555 = vunpack.c.l.b16 %v475
    %v556 = vpack.c.b16 %v555, %v554
    %vm558 = vcmask 130048
    %v560 = vsel %vm558, %v473, 0
    %562 = vmatprep.subr.bf16.mxu0 0
    %563 = vmatpush1.bf16.msra.mxu0 0
    %564 = vmatprep.subr.bf16.mxu0 0
    %565 = vmatpush1.bf16.msra.mxu0 0
    %566 = vmatprep.subr.bf16.mxu0 0
    %567 = vmatpush1.bf16.msra.mxu0 0
    %568 = vmatprep.subr.bf16.mxu0 0
    %569 = vmatpush1.bf16.msra.mxu0 0
    %570 = vmatprep.subr.bf16.mxu0 0
    %571 = vmatpush1.bf16.msra.mxu0 0
    %572 = vmatprep.subr.bf16.mxu0 0
    %573 = vmatpush1.bf16.msra.mxu0 0
    %574 = vmatprep.subr.bf16.mxu0 0
    %575 = vmatpush1.bf16.msra.mxu0 0
    %576 = vmatprep.subr.bf16.mxu0 0
    %577 = vmatpush1.bf16.msra.mxu0 %v556
    %578 = vmatprep.subr.bf16.mxu0 0
    %579 = vmatpush2.bf16.msra.mxu0 0
    %580 = vmatprep.subr.bf16.mxu0 0
    %581 = vmatpush2.bf16.msra.mxu0 0
    %582 = vmatprep.subr.bf16.mxu0 0
    %583 = vmatpush2.bf16.msra.mxu0 0
    %584 = vmatprep.subr.bf16.mxu0 0
    %585 = vmatpush2.bf16.msra.mxu0 0
    %586 = vmatprep.subr.bf16.mxu0 0
    %587 = vmatpush2.bf16.msra.mxu0 0
    %588 = vmatprep.subr.bf16.mxu0 0
    %589 = vmatpush2.bf16.msra.mxu0 0
    %590 = vmatprep.subr.bf16.mxu0 0
    %591 = vmatpush2.bf16.msra.mxu0 0
    %592 = vmatprep.subr.bf16.mxu0 0
    %593 = vmatpush2.bf16.msra.mxu0 0
    %594 = vmatprep.mubr.bf16.mxu0 0
    %595 = vmatmul.mubr.bf16.gmra.mxu0 %v560
    %v596 = vpop.f32.mrf.mxu0
    %v597 = vadd.f32 %v547, %v596
    %v598 = vpop.f32.mrf.mxu0
    %v599 = vpop.f32.mrf.mxu0
    %v600 = vpop.f32.mrf.mxu0
    %601 = vdwg.mxu0
    %v602 = vld [vmem:[%s27] sm:$0x1]
    %v604 = vlaneseq
    %v605 = vshrl.u32 %v604, 7
    %v606 = vsub.s32 0, %v605
    %v607 = vrot.slane %v602, %v606
    %v609 = vadd.f32 %v597, %v607
    %v610 = vmax.f32 %v609, 0.0
    %v611 = vld [vmem:[%s29] sm:$0x1]
    %v612 = vld [vmem:[%s31] sm:$0x1]
    %613 = vadd.xlane.f32.xlu0 %v610
    %v614 = vpop.xlane.xlu0 %613
    %v615 = vrcp.pop 128.0
    %v616 = vmul.f32 %v614, %v615
    %v617 = vmul.f32 %v610, %v610
    %618 = vadd.xlane.f32.xlu0 %v617
    %v619 = vpop.xlane.xlu0 %618
    %v620 = vmul.f32 %v619, %v615
    %v621 = vmul.f32 %v616, %v616
    %v622 = vsub.f32 %v620, %v621
    %v623 = vsub.f32 %v610, %v616
    %v624 = vadd.f32 %v622, 1e-05
    %v625 = vrsqrt.pop %v624
    %v626 = vmul.f32 %v623, %v625
    %v628 = vlaneseq
    %v629 = vshrl.u32 %v628, 7
    %v630 = vsub.s32 0, %v629
    %v631 = vrot.slane %v611, %v630
    %v633 = vmul.f32 %v626, %v631
    %v635 = vlaneseq
    %v636 = vshrl.u32 %v635, 7
    %v637 = vsub.s32 0, %v636
    %v638 = vrot.slane %v612, %v637
    %v640 = vadd.f32 %v633, %v638
    %v641 = vpack.c.bf16 %v640, %v640
    %v642 = vld [vmem:[#allocation13] sm:$0xf]
    %v643 = vld [vmem:[#allocation13 + $0x4] sm:$0xf]
    %v644 = vld [vmem:[#allocation13 + $0x8] sm:$0xf]
    %v645 = vld [vmem:[#allocation13 + $0xc] sm:$0xf]
    %v646 = vld [vmem:[#allocation13 + $0x10] sm:$0xf]
    %v647 = vld [vmem:[#allocation13 + $0x14] sm:$0xf]
    %v648 = vld [vmem:[#allocation13 + $0x18] sm:$0xf]
    %v649 = vld [vmem:[#allocation13 + $0x1c] sm:$0xf]
    %v650 = vld [vmem:[#allocation13 + $0x20] sm:$0xf]
    %v651 = vld [vmem:[#allocation13 + $0x24] sm:$0xf]
    %v652 = vld [vmem:[#allocation13 + $0x28] sm:$0xf]
    %v653 = vld [vmem:[#allocation13 + $0x2c] sm:$0xf]
    %v654 = vld [vmem:[#allocation13 + $0x30] sm:$0xf]
    %v655 = vld [vmem:[#allocation13 + $0x34] sm:$0xf]
    %v656 = vld [vmem:[#allocation13 + $0x38] sm:$0xf]
    %v657 = vld [vmem:[#allocation13 + $0x3c] sm:$0xf]
    %v658 = vld [vmem:[%s35] sm:$0x1]
    %v660 = vlaneseq
    %v661 = vshrl.u32 %v660, 7
    %v662 = vsub.s32 0, %v661
    %v663 = vrot.slane %v658, %v662
    %v681 = vunpack.c.l.b16 %v642
    %v682 = vunpack.c.l.b16 %v643
    %v683 = vunpack.c.l.b16 %v644
    %v684 = vunpack.c.l.b16 %v645
    %v685 = vunpack.c.l.b16 %v646
    %v686 = vunpack.c.l.b16 %v647
    %v687 = vunpack.c.l.b16 %v648
    %v688 = vunpack.c.l.b16 %v649
    %v689 = vunpack.c.l.b16 %v650
    %v690 = vunpack.c.l.b16 %v651
    %v691 = vunpack.c.l.b16 %v652
    %v692 = vunpack.c.l.b16 %v653
    %v693 = vunpack.c.l.b16 %v654
    %v694 = vunpack.c.l.b16 %v655
    %v695 = vunpack.c.l.b16 %v656
    %v696 = vunpack.c.l.b16 %v657
    %v697 = vpack.c.b16 %v682, %v681
    %v698 = vpack.c.b16 %v684, %v683
    %v699 = vpack.c.b16 %v686, %v685
    %v700 = vpack.c.b16 %v688, %v687
    %v701 = vpack.c.b16 %v690, %v689
    %v702 = vpack.c.b16 %v692, %v691
    %v703 = vpack.c.b16 %v694, %v693
    %v704 = vpack.c.b16 %v696, %v695
    %713 = vmatprep.subr.bf16.mxu0 0
    %714 = vmatpush1.bf16.msra.mxu0 %v704
    %715 = vmatprep.subr.bf16.mxu0 0
    %716 = vmatpush1.bf16.msra.mxu0 %v703
    %717 = vmatprep.subr.bf16.mxu0 0
    %718 = vmatpush1.bf16.msra.mxu0 %v702
    %719 = vmatprep.subr.bf16.mxu0 0
    %720 = vmatpush1.bf16.msra.mxu0 %v701
    %721 = vmatprep.subr.bf16.mxu0 0
    %722 = vmatpush1.bf16.msra.mxu0 %v700
    %723 = vmatprep.subr.bf16.mxu0 0
    %724 = vmatpush1.bf16.msra.mxu0 %v699
    %725 = vmatprep.subr.bf16.mxu0 0
    %726 = vmatpush1.bf16.msra.mxu0 %v698
    %727 = vmatprep.subr.bf16.mxu0 0
    %728 = vmatpush1.bf16.msra.mxu0 %v697
    %729 = vmatprep.subr.bf16.mxu0 0
    %730 = vmatpush2.bf16.msra.mxu0 0
    %731 = vmatprep.subr.bf16.mxu0 0
    %732 = vmatpush2.bf16.msra.mxu0 0
    %733 = vmatprep.subr.bf16.mxu0 0
    %734 = vmatpush2.bf16.msra.mxu0 0
    %735 = vmatprep.subr.bf16.mxu0 0
    %736 = vmatpush2.bf16.msra.mxu0 0
    %737 = vmatprep.subr.bf16.mxu0 0
    %738 = vmatpush2.bf16.msra.mxu0 0
    %739 = vmatprep.subr.bf16.mxu0 0
    %740 = vmatpush2.bf16.msra.mxu0 0
    %741 = vmatprep.subr.bf16.mxu0 0
    %742 = vmatpush2.bf16.msra.mxu0 0
    %743 = vmatprep.subr.bf16.mxu0 0
    %744 = vmatpush2.bf16.msra.mxu0 0
    %745 = vmatprep.mubr.bf16.mxu0 0
    %746 = vmatmul.mubr.bf16.gmra.mxu0 %v641
    %v747 = vpop.f32.mrf.mxu0
    %v748 = vadd.f32 %v663, %v747
    %v749 = vpop.f32.mrf.mxu0
    %v750 = vpop.f32.mrf.mxu0
    %v751 = vpop.f32.mrf.mxu0
    %752 = vdwg.mxu0
    %v753 = vmax.f32 %v748, 0.0
    %v754 = vld [vmem:[%s37] sm:$0x1]
    %v755 = vld [vmem:[%s39] sm:$0x1]
    %756 = vadd.xlane.f32.xlu0 %v753
    %v757 = vpop.xlane.xlu0 %756
    %v758 = vmul.f32 %v757, %v615
    %v759 = vmul.f32 %v753, %v753
    %760 = vadd.xlane.f32.xlu0 %v759
    %v761 = vpop.xlane.xlu0 %760
    %v762 = vmul.f32 %v761, %v615
    %v763 = vmul.f32 %v758, %v758
    %v764 = vsub.f32 %v762, %v763
    %v765 = vsub.f32 %v753, %v758
    %v766 = vadd.f32 %v764, 1e-05
    %v767 = vrsqrt.pop %v766
    %v768 = vmul.f32 %v765, %v767
    %v770 = vlaneseq
    %v771 = vshrl.u32 %v770, 7
    %v772 = vsub.s32 0, %v771
    %v773 = vrot.slane %v754, %v772
    %v775 = vmul.f32 %v768, %v773
    %v777 = vlaneseq
    %v778 = vshrl.u32 %v777, 7
    %v779 = vsub.s32 0, %v778
    %v780 = vrot.slane %v755, %v779
    %v782 = vadd.f32 %v775, %v780
    %v783 = vpack.c.bf16 %v782, %v782
    %v784 = vld [vmem:[#allocation14] sm:$0xf]
    %v785 = vld [vmem:[#allocation14 + $0x4] sm:$0xf]
    %v786 = vld [vmem:[#allocation14 + $0x8] sm:$0xf]
    %v787 = vld [vmem:[#allocation14 + $0xc] sm:$0xf]
    %v788 = vld [vmem:[#allocation14 + $0x10] sm:$0xf]
    %v789 = vld [vmem:[#allocation14 + $0x14] sm:$0xf]
    %v790 = vld [vmem:[#allocation14 + $0x18] sm:$0xf]
    %v791 = vld [vmem:[#allocation14 + $0x1c] sm:$0xf]
    %v792 = vld [vmem:[#allocation14 + $0x20] sm:$0xf]
    %v793 = vld [vmem:[#allocation14 + $0x24] sm:$0xf]
    %v794 = vld [vmem:[#allocation14 + $0x28] sm:$0xf]
    %v795 = vld [vmem:[#allocation14 + $0x2c] sm:$0xf]
    %v796 = vld [vmem:[#allocation14 + $0x30] sm:$0xf]
    %v797 = vld [vmem:[#allocation14 + $0x34] sm:$0xf]
    %v798 = vld [vmem:[#allocation14 + $0x38] sm:$0xf]
    %v799 = vld [vmem:[#allocation14 + $0x3c] sm:$0xf]
    %v800 = vld [vmem:[%s43] sm:$0x1]
    %v802 = vlaneseq
    %v803 = vshrl.u32 %v802, 7
    %v804 = vsub.s32 0, %v803
    %v805 = vrot.slane %v800, %v804
    %v823 = vunpack.c.l.b16 %v784
    %v824 = vunpack.c.l.b16 %v785
    %v825 = vunpack.c.l.b16 %v786
    %v826 = vunpack.c.l.b16 %v787
    %v827 = vunpack.c.l.b16 %v788
    %v828 = vunpack.c.l.b16 %v789
    %v829 = vunpack.c.l.b16 %v790
    %v830 = vunpack.c.l.b16 %v791
    %v831 = vunpack.c.l.b16 %v792
    %v832 = vunpack.c.l.b16 %v793
    %v833 = vunpack.c.l.b16 %v794
    %v834 = vunpack.c.l.b16 %v795
    %v835 = vunpack.c.l.b16 %v796
    %v836 = vunpack.c.l.b16 %v797
    %v837 = vunpack.c.l.b16 %v798
    %v838 = vunpack.c.l.b16 %v799
    %v839 = vpack.c.b16 %v824, %v823
    %v840 = vpack.c.b16 %v826, %v825
    %v841 = vpack.c.b16 %v828, %v827
    %v842 = vpack.c.b16 %v830, %v829
    %v843 = vpack.c.b16 %v832, %v831
    %v844 = vpack.c.b16 %v834, %v833
    %v845 = vpack.c.b16 %v836, %v835
    %v846 = vpack.c.b16 %v838, %v837
    %855 = vmatprep.subr.bf16.mxu0 0
    %856 = vmatpush1.bf16.msra.mxu0 %v846
    %857 = vmatprep.subr.bf16.mxu0 0
    %858 = vmatpush1.bf16.msra.mxu0 %v845
    %859 = vmatprep.subr.bf16.mxu0 0
    %860 = vmatpush1.bf16.msra.mxu0 %v844
    %861 = vmatprep.subr.bf16.mxu0 0
    %862 = vmatpush1.bf16.msra.mxu0 %v843
    %863 = vmatprep.subr.bf16.mxu0 0
    %864 = vmatpush1.bf16.msra.mxu0 %v842
    %865 = vmatprep.subr.bf16.mxu0 0
    %866 = vmatpush1.bf16.msra.mxu0 %v841
    %867 = vmatprep.subr.bf16.mxu0 0
    %868 = vmatpush1.bf16.msra.mxu0 %v840
    %869 = vmatprep.subr.bf16.mxu0 0
    %870 = vmatpush1.bf16.msra.mxu0 %v839
    %871 = vmatprep.subr.bf16.mxu0 0
    %872 = vmatpush2.bf16.msra.mxu0 0
    %873 = vmatprep.subr.bf16.mxu0 0
    %874 = vmatpush2.bf16.msra.mxu0 0
    %875 = vmatprep.subr.bf16.mxu0 0
    %876 = vmatpush2.bf16.msra.mxu0 0
    %877 = vmatprep.subr.bf16.mxu0 0
    %878 = vmatpush2.bf16.msra.mxu0 0
    %879 = vmatprep.subr.bf16.mxu0 0
    %880 = vmatpush2.bf16.msra.mxu0 0
    %881 = vmatprep.subr.bf16.mxu0 0
    %882 = vmatpush2.bf16.msra.mxu0 0
    %883 = vmatprep.subr.bf16.mxu0 0
    %884 = vmatpush2.bf16.msra.mxu0 0
    %885 = vmatprep.subr.bf16.mxu0 0
    %886 = vmatpush2.bf16.msra.mxu0 0
    %887 = vmatprep.mubr.bf16.mxu0 0
    %888 = vmatmul.mubr.bf16.gmra.mxu0 %v783
    %v889 = vpop.f32.mrf.mxu0
    %v890 = vadd.f32 %v805, %v889
    %v891 = vpop.f32.mrf.mxu0
    %v892 = vpop.f32.mrf.mxu0
    %v893 = vpop.f32.mrf.mxu0
    %894 = vdwg.mxu0
    %v895 = vmax.f32 %v890, 0.0
    %vm896 = vcmp.ne.f32.partialorder %v890, %v890
    %v897 = vadd.f32 %v890, 0.0
    %v898 = vand.u32 2147483647, %v890
    %v899 = vsub.f32 0.0, %v898
    %v900 = vmul.f32 %v899, 1.442695
    %v901 = vpow.pop %v900
    %v902 = vadd.f32 %v901, 1.0
    %v903 = vlog2.pop %v902
    %v904 = vmul.f32 %v903, 0.6931472
    %v905 = vmul.f32 -0.5, %v901
    %v906 = vadd.f32 %v905, 1.0
    %v907 = vmul.f32 %v906, %v901
    %v908 = vand.u32 2147483647, %v901
    %vm909 = vcmp.lt.f32.partialorder %v908, 0.0004427343
    %v910 = vsel %vm909, %v907, %v904
    %v911 = vadd.f32 %v895, %v910
    %v912 = vsel %vm896, %v897, %v911
    %vm913 = vcmp.ne.f32.partialorder %v912, %v912
    %v914 = vsel %vm913, 1.0, %v912
    %v915 = vmax.f32 %v914, 0.001
    %v916 = vmin.f32 %v915, 10.0
    %917 = vst [vmem:[#allocation20] sm:$0xff] %v916
    %v918 = vld [vmem:[#allocation7] sm:$0xff]
    %v919 = vmul.f32 %v916, %v916
    %v920 = vmul.f32 %v919, %v916
    %v921 = vmul.f32 %v919, %v919
    %v922 = vmul.f32 %v920, %v919
    %v923 = vmul.f32 %v920, %v920
    %v924 = vmul.f32 %v921, %v920
    %v925 = vmul.f32 %v921, %v921
    %v926 = vmul.f32 %v922, %v921
    %v927 = vsub.f32 0.0, %v916
    %v928 = vmul.f32 %v927, 1.442695
    %v929 = vpow.pop %v928
    %v930 = vmul.f32 %v929, %v916
    %v931 = vmul.f32 %v919, 0.5
    %v932 = vmul.f32 %v929, %v931
    %v933 = vmul.f32 %v920, 0.16666667
    %v934 = vmul.f32 %v929, %v933
    %v935 = vmul.f32 %v921, 0.041666668
    %v936 = vmul.f32 %v929, %v935
    %v937 = vmul.f32 %v922, 0.008333334
    %v938 = vmul.f32 %v929, %v937
    %v939 = vmul.f32 %v923, 0.0013888889
    %v940 = vmul.f32 %v929, %v939
    %v941 = vmul.f32 %v924, 0.0001984127
    %v942 = vmul.f32 %v929, %v941
    %v943 = vmul.f32 %v925, 2.4801588e-05
    %v944 = vmul.f32 %v929, %v943
    %v945 = vmul.f32 %v926, 2.7557319e-06
    %v946 = vmul.f32 %v929, %v945
    %v947 = vadd.f32 %v930, %v929
    %v948 = vadd.f32 %v932, %v930
    %v949 = vadd.f32 %v934, %v932
    %v950 = vadd.f32 %v936, %v934
    %v951 = vadd.f32 %v938, %v936
    %v952 = vadd.f32 %v940, %v938
    %v953 = vadd.f32 %v942, %v940
    %v954 = vadd.f32 %v944, %v942
    %v955 = vadd.f32 %v946, %v944
    %v956 = vadd.f32 %v948, %v929
    %v957 = vadd.f32 %v949, %v947
    %v958 = vadd.f32 %v950, %v948
    %v959 = vadd.f32 %v951, %v949
    %v960 = vadd.f32 %v952, %v950
    %v961 = vadd.f32 %v953, %v951
    %v962 = vadd.f32 %v954, %v952
    %v963 = vadd.f32 %v955, %v953
    %v964 = vadd.f32 %v958, %v929
    %v965 = vadd.f32 %v959, %v947
    %v966 = vadd.f32 %v960, %v956
    %v967 = vadd.f32 %v961, %v957
    %v968 = vadd.f32 %v962, %v958
    %v969 = vadd.f32 %v963, %v959
    %v970 = vadd.f32 %v968, %v929
    %v971 = vadd.f32 %v969, %v947
    %vm972 = vcmp.gt.f32.partialorder %v918, %v929
    %v973 = vsel %vm972, 1, 0
    %v974 = vcvt.s32.f32 %v973
    %vm975 = vcmp.gt.f32.partialorder %v918, %v947
    %v976 = vsel %vm975, 1, 0
    %v977 = vcvt.s32.f32 %v976
    %vm978 = vcmp.gt.f32.partialorder %v918, %v956
    %v979 = vsel %vm978, 1, 0
    %v980 = vcvt.s32.f32 %v979
    %vm981 = vcmp.gt.f32.partialorder %v918, %v957
    %v982 = vsel %vm981, 1, 0
    %v983 = vcvt.s32.f32 %v982
    %vm984 = vcmp.gt.f32.partialorder %v918, %v964
    %v985 = vsel %vm984, 1, 0
    %v986 = vcvt.s32.f32 %v985
    %vm987 = vcmp.gt.f32.partialorder %v918, %v965
    %v988 = vsel %vm987, 1, 0
    %v989 = vcvt.s32.f32 %v988
    %vm990 = vcmp.gt.f32.partialorder %v918, %v966
    %v991 = vsel %vm990, 1, 0
    %v992 = vcvt.s32.f32 %v991
    %vm993 = vcmp.gt.f32.partialorder %v918, %v967
    %v994 = vsel %vm993, 1, 0
    %v995 = vcvt.s32.f32 %v994
    %vm996 = vcmp.gt.f32.partialorder %v918, %v970
    %v997 = vsel %vm996, 1, 0
    %v998 = vcvt.s32.f32 %v997
    %vm999 = vcmp.gt.f32.partialorder %v918, %v971
    %v1000 = vsel %vm999, 1, 0
    %v1001 = vcvt.s32.f32 %v1000
    %v1002 = vadd.f32 %v974, %v977
    %v1003 = vadd.f32 %v980, %v983
    %v1004 = vadd.f32 %v986, %v989
    %v1005 = vadd.f32 %v992, %v995
    %v1006 = vadd.f32 %v998, %v1001
    %v1007 = vadd.f32 %v1002, %v1003
    %v1008 = vadd.f32 %v1004, %v1005
    %v1009 = vadd.f32 %v1007, %v1008
    %v1010 = vadd.f32 %v1009, %v1006
    %v1011 = vpack.c.bf16 %v1010, %v1010
    %v1012 = vld [vmem:[#allocation16] sm:$0xf]
    %v1013 = vld [vmem:[#allocation16 + $0x4] sm:$0xf]
    %v1014 = vld [vmem:[#allocation16 + $0x8] sm:$0xf]
    %v1015 = vld [vmem:[#allocation16 + $0xc] sm:$0xf]
    %v1016 = vld [vmem:[#allocation16 + $0x10] sm:$0xf]
    %v1017 = vld [vmem:[#allocation16 + $0x14] sm:$0xf]
    %v1018 = vld [vmem:[#allocation16 + $0x18] sm:$0xf]
    %v1019 = vld [vmem:[#allocation16 + $0x1c] sm:$0xf]
    %v1020 = vld [vmem:[#allocation16 + $0x20] sm:$0xf]
    %v1021 = vld [vmem:[#allocation16 + $0x24] sm:$0xf]
    %v1022 = vld [vmem:[#allocation16 + $0x28] sm:$0xf]
    %v1023 = vld [vmem:[#allocation16 + $0x2c] sm:$0xf]
    %v1024 = vld [vmem:[#allocation16 + $0x30] sm:$0xf]
    %v1025 = vld [vmem:[#allocation16 + $0x34] sm:$0xf]
    %v1026 = vld [vmem:[#allocation16 + $0x38] sm:$0xf]
    %v1027 = vld [vmem:[#allocation16 + $0x3c] sm:$0xf]
    %v1028 = vld [vmem:[%s47] sm:$0x1]
    %v1030 = vlaneseq
    %v1031 = vshrl.u32 %v1030, 7
    %v1032 = vsub.s32 0, %v1031
    %v1033 = vrot.slane %v1028, %v1032
    %v1051 = vunpack.c.l.b16 %v1012
    %v1052 = vunpack.c.l.b16 %v1013
    %v1053 = vunpack.c.l.b16 %v1014
    %v1054 = vunpack.c.l.b16 %v1015
    %v1055 = vunpack.c.l.b16 %v1016
    %v1056 = vunpack.c.l.b16 %v1017
    %v1057 = vunpack.c.l.b16 %v1018
    %v1058 = vunpack.c.l.b16 %v1019
    %v1059 = vunpack.c.l.b16 %v1020
    %v1060 = vunpack.c.l.b16 %v1021
    %v1061 = vunpack.c.l.b16 %v1022
    %v1062 = vunpack.c.l.b16 %v1023
    %v1063 = vunpack.c.l.b16 %v1024
    %v1064 = vunpack.c.l.b16 %v1025
    %v1065 = vunpack.c.l.b16 %v1026
    %v1066 = vunpack.c.l.b16 %v1027
    %v1067 = vpack.c.b16 %v1052, %v1051
    %v1068 = vpack.c.b16 %v1054, %v1053
    %v1069 = vpack.c.b16 %v1056, %v1055
    %v1070 = vpack.c.b16 %v1058, %v1057
    %v1071 = vpack.c.b16 %v1060, %v1059
    %v1072 = vpack.c.b16 %v1062, %v1061
    %v1073 = vpack.c.b16 %v1064, %v1063
    %v1074 = vpack.c.b16 %v1066, %v1065
    %1083 = vmatprep.subr.bf16.mxu0 0
    %1084 = vmatpush1.bf16.msra.mxu0 %v1074
    %1085 = vmatprep.subr.bf16.mxu0 0
    %1086 = vmatpush1.bf16.msra.mxu0 %v1073
    %1087 = vmatprep.subr.bf16.mxu0 0
    %1088 = vmatpush1.bf16.msra.mxu0 %v1072
    %1089 = vmatprep.subr.bf16.mxu0 0
    %1090 = vmatpush1.bf16.msra.mxu0 %v1071
    %1091 = vmatprep.subr.bf16.mxu0 0
    %1092 = vmatpush1.bf16.msra.mxu0 %v1070
    %1093 = vmatprep.subr.bf16.mxu0 0
    %1094 = vmatpush1.bf16.msra.mxu0 %v1069
    %1095 = vmatprep.subr.bf16.mxu0 0
    %1096 = vmatpush1.bf16.msra.mxu0 %v1068
    %1097 = vmatprep.subr.bf16.mxu0 0
    %1098 = vmatpush1.bf16.msra.mxu0 %v1067
    %1099 = vmatprep.subr.bf16.mxu0 0
    %1100 = vmatpush2.bf16.msra.mxu0 0
    %1101 = vmatprep.subr.bf16.mxu0 0
    %1102 = vmatpush2.bf16.msra.mxu0 0
    %1103 = vmatprep.subr.bf16.mxu0 0
    %1104 = vmatpush2.bf16.msra.mxu0 0
    %1105 = vmatprep.subr.bf16.mxu0 0
    %1106 = vmatpush2.bf16.msra.mxu0 0
    %1107 = vmatprep.subr.bf16.mxu0 0
    %1108 = vmatpush2.bf16.msra.mxu0 0
    %1109 = vmatprep.subr.bf16.mxu0 0
    %1110 = vmatpush2.bf16.msra.mxu0 0
    %1111 = vmatprep.subr.bf16.mxu0 0
    %1112 = vmatpush2.bf16.msra.mxu0 0
    %1113 = vmatprep.subr.bf16.mxu0 0
    %1114 = vmatpush2.bf16.msra.mxu0 0
    %1115 = vmatprep.mubr.bf16.mxu0 0
    %1116 = vmatmul.mubr.bf16.gmra.mxu0 %v1011
    %v1117 = vpop.f32.mrf.mxu0
    %v1118 = vadd.f32 %v1033, %v1117
    %v1119 = vpop.f32.mrf.mxu0
    %v1120 = vpop.f32.mrf.mxu0
    %v1121 = vpop.f32.mrf.mxu0
    %1122 = vdwg.mxu0
    %v1123 = vmax.f32 %v1118, 0.0
    %v1124 = vld [vmem:[%s49] sm:$0x1]
    %v1125 = vld [vmem:[%s51] sm:$0x1]
    %1126 = vadd.xlane.f32.xlu0 %v1123
    %v1127 = vpop.xlane.xlu0 %1126
    %v1128 = vmul.f32 %v1127, %v615
    %v1129 = vmul.f32 %v1123, %v1123
    %1130 = vadd.xlane.f32.xlu0 %v1129
    %v1131 = vpop.xlane.xlu0 %1130
    %v1132 = vmul.f32 %v1131, %v615
    %v1133 = vmul.f32 %v1128, %v1128
    %v1134 = vsub.f32 %v1132, %v1133
    %v1135 = vsub.f32 %v1123, %v1128
    %v1136 = vadd.f32 %v1134, 1e-05
    %v1137 = vrsqrt.pop %v1136
    %v1138 = vmul.f32 %v1135, %v1137
    %v1140 = vlaneseq
    %v1141 = vshrl.u32 %v1140, 7
    %v1142 = vsub.s32 0, %v1141
    %v1143 = vrot.slane %v1124, %v1142
    %v1145 = vmul.f32 %v1138, %v1143
    %v1147 = vlaneseq
    %v1148 = vshrl.u32 %v1147, 7
    %v1149 = vsub.s32 0, %v1148
    %v1150 = vrot.slane %v1125, %v1149
    %v1152 = vadd.f32 %v1145, %v1150
    %v1153 = vpack.c.bf16 %v1152, %v1152
    %v1154 = vld [vmem:[#allocation17] sm:$0xf]
    %v1155 = vld [vmem:[#allocation17 + $0x4] sm:$0xf]
    %v1156 = vld [vmem:[#allocation17 + $0x8] sm:$0xf]
    %v1157 = vld [vmem:[#allocation17 + $0xc] sm:$0xf]
    %v1158 = vld [vmem:[#allocation17 + $0x10] sm:$0xf]
    %v1159 = vld [vmem:[#allocation17 + $0x14] sm:$0xf]
    %v1160 = vld [vmem:[#allocation17 + $0x18] sm:$0xf]
    %v1161 = vld [vmem:[#allocation17 + $0x1c] sm:$0xf]
    %v1162 = vld [vmem:[#allocation17 + $0x20] sm:$0xf]
    %v1163 = vld [vmem:[#allocation17 + $0x24] sm:$0xf]
    %v1164 = vld [vmem:[#allocation17 + $0x28] sm:$0xf]
    %v1165 = vld [vmem:[#allocation17 + $0x2c] sm:$0xf]
    %v1166 = vld [vmem:[#allocation17 + $0x30] sm:$0xf]
    %v1167 = vld [vmem:[#allocation17 + $0x34] sm:$0xf]
    %v1168 = vld [vmem:[#allocation17 + $0x38] sm:$0xf]
    %v1169 = vld [vmem:[#allocation17 + $0x3c] sm:$0xf]
    %v1170 = vld [vmem:[%s55] sm:$0x1]
    %v1172 = vlaneseq
    %v1173 = vshrl.u32 %v1172, 7
    %v1174 = vsub.s32 0, %v1173
    %v1175 = vrot.slane %v1170, %v1174
    %v1193 = vunpack.c.l.b16 %v1154
    %v1194 = vunpack.c.l.b16 %v1155
    %v1195 = vunpack.c.l.b16 %v1156
    %v1196 = vunpack.c.l.b16 %v1157
    %v1197 = vunpack.c.l.b16 %v1158
    %v1198 = vunpack.c.l.b16 %v1159
    %v1199 = vunpack.c.l.b16 %v1160
    %v1200 = vunpack.c.l.b16 %v1161
    %v1201 = vunpack.c.l.b16 %v1162
    %v1202 = vunpack.c.l.b16 %v1163
    %v1203 = vunpack.c.l.b16 %v1164
    %v1204 = vunpack.c.l.b16 %v1165
    %v1205 = vunpack.c.l.b16 %v1166
    %v1206 = vunpack.c.l.b16 %v1167
    %v1207 = vunpack.c.l.b16 %v1168
    %v1208 = vunpack.c.l.b16 %v1169
    %v1209 = vpack.c.b16 %v1194, %v1193
    %v1210 = vpack.c.b16 %v1196, %v1195
    %v1211 = vpack.c.b16 %v1198, %v1197
    %v1212 = vpack.c.b16 %v1200, %v1199
    %v1213 = vpack.c.b16 %v1202, %v1201
    %v1214 = vpack.c.b16 %v1204, %v1203
    %v1215 = vpack.c.b16 %v1206, %v1205
    %v1216 = vpack.c.b16 %v1208, %v1207
    %1225 = vmatprep.subr.bf16.mxu0 0
    %1226 = vmatpush1.bf16.msra.mxu0 %v1216
    %1227 = vmatprep.subr.bf16.mxu0 0
    %1228 = vmatpush1.bf16.msra.mxu0 %v1215
    %1229 = vmatprep.subr.bf16.mxu0 0
    %1230 = vmatpush1.bf16.msra.mxu0 %v1214
    %1231 = vmatprep.subr.bf16.mxu0 0
    %1232 = vmatpush1.bf16.msra.mxu0 %v1213
    %1233 = vmatprep.subr.bf16.mxu0 0
    %1234 = vmatpush1.bf16.msra.mxu0 %v1212
    %1235 = vmatprep.subr.bf16.mxu0 0
    %1236 = vmatpush1.bf16.msra.mxu0 %v1211
    %1237 = vmatprep.subr.bf16.mxu0 0
    %1238 = vmatpush1.bf16.msra.mxu0 %v1210
    %1239 = vmatprep.subr.bf16.mxu0 0
    %1240 = vmatpush1.bf16.msra.mxu0 %v1209
    %1241 = vmatprep.subr.bf16.mxu0 0
    %1242 = vmatpush2.bf16.msra.mxu0 0
    %1243 = vmatprep.subr.bf16.mxu0 0
    %1244 = vmatpush2.bf16.msra.mxu0 0
    %1245 = vmatprep.subr.bf16.mxu0 0
    %1246 = vmatpush2.bf16.msra.mxu0 0
    %1247 = vmatprep.subr.bf16.mxu0 0
    %1248 = vmatpush2.bf16.msra.mxu0 0
    %1249 = vmatprep.subr.bf16.mxu0 0
    %1250 = vmatpush2.bf16.msra.mxu0 0
    %1251 = vmatprep.subr.bf16.mxu0 0
    %1252 = vmatpush2.bf16.msra.mxu0 0
    %1253 = vmatprep.subr.bf16.mxu0 0
    %1254 = vmatpush2.bf16.msra.mxu0 0
    %1255 = vmatprep.subr.bf16.mxu0 0
    %1256 = vmatpush2.bf16.msra.mxu0 0
    %1257 = vmatprep.mubr.bf16.mxu0 0
    %1258 = vmatmul.mubr.bf16.gmra.mxu0 %v1153
    %v1259 = vpop.f32.mrf.mxu0
    %v1260 = vadd.f32 %v1175, %v1259
    %v1261 = vpop.f32.mrf.mxu0
    %v1262 = vpop.f32.mrf.mxu0
    %v1263 = vpop.f32.mrf.mxu0
    %1264 = vdwg.mxu0
    %vm1265 = vcmp.ne.f32.partialorder %v1260, %v1260
    %v1266 = vsel %vm1265, 0.0, %v1260
    %vm1267 = vcmp.eq.f32.partialorder %v1266, inf
    %v1268 = vsel %vm1267, 1.0, %v1266
    %vm1269 = vcmp.eq.f32.partialorder %v1268, -inf
    %v1270 = vsel %vm1269, -1.0, %v1268
    %v1271 = vtanh.pop %v1270
    %1272 = vst [vmem:[#allocation19] sm:$0xff] %v1271
    // Predicated region
    $region154: #{tpu_custom_call.1} parent=1 // pred_check
      _
    $region155: #{tpu_custom_call.1} parent=1 // pred_check_branch
      %1274 = sbr.rel (0) target = $region157
    $region156: #{tpu_custom_call.1} parent=1 // pred_region
      %s1276 = ssub.s32 128, 128
      %1277 = vsyncadd [#allocation4], %s1276
      %s1279 = sshll.u32 [#allocation19], 4
      %s1280 = int_to_ptr.vmem [resolvable:$true] %s1279
      %1282 = dma.vmem_to_hbm [thread:$0]  %s1280, 128, %s57, [#allocation4]
    $region157: #{tpu_custom_call.1} parent=1 // pred_fallthru
      _
    // Predicated region
    $region158: #{tpu_custom_call.1} parent=1 // pred_check
      _
    $region159: #{tpu_custom_call.1} parent=1 // pred_check_branch
      %1284 = sbr.rel (0) target = $region161
    $region160: #{tpu_custom_call.1} parent=1 // pred_region
      %s1286 = ssub.s32 128, 128
      %1287 = vsyncadd [#allocation21], %s1286
      %s1289 = sshll.u32 [#allocation20], 4
      %s1290 = int_to_ptr.vmem [resolvable:$true] %s1289
      %1292 = dma.vmem_to_hbm [thread:$0]  %s1290, 128, %s59, [#allocation21]
    $region161: #{tpu_custom_call.1} parent=1 // pred_fallthru
      _
    // Predicated region
    $region162: #{tpu_custom_call.1} parent=1 // pred_check
      _
    $region163: #{tpu_custom_call.1} parent=1 // pred_check_branch
      %1294 = sbr.rel (0) target = $region165
    $region164: #{tpu_custom_call.1} parent=1 // pred_region
      %1295 = dma.done [#allocation4], 128
    $region165: #{tpu_custom_call.1} parent=1 // pred_fallthru
      _
    // Predicated region
    $region166: #{tpu_custom_call.1} parent=1 // pred_check
      _
    $region167: #{tpu_custom_call.1} parent=1 // pred_check_branch
      %1297 = sbr.rel (0) target = $region169
    $region168: #{tpu_custom_call.1} parent=1 // pred_region
      %1298 = dma.done [#allocation21], 128
    $region169: #{tpu_custom_call.1} parent=1 // pred_fallthru
      _
    %1299 = vsyncpa [#allocation3], 1
    %1300 = vsyncpa [#allocation6], 1
    %1301 = vsyncpa [#allocation9], 1
    %1302 = vsyncpa [#allocation12], 1
    %1303 = vsyncpa [#allocation15], 1
    %1304 = vsyncpa [#allocation18], 1
    %1305 = vsyncpa [#allocation4], 1
    %1306 = vsyncpa [#allocation21], 1

</llo_original>
